<compile_context>
chip_gen: v7x
topology: tpu7x:2x2x1
jax: 0.10.0
libtpu: 0.0.40
codegen_flags: <defaults>
</compile_context>

<pallas_src>
import functools
import math

import jax
import jax.numpy as jnp
import numpy as np
from jax import lax
from jax.experimental import pallas as pl
from jax.experimental.pallas import tpu as pltpu


# ------------------------------ helpers ------------------------------------ #

def _round_up(n, m):
    return ((n + m - 1) // m) * m


def _vmem_capacity_bytes():
    try:
        return int(pltpu.get_tpu_info().vmem_capacity_bytes)
    except Exception:
        return 64 * 1024 * 1024  # conservative fallback (v7x per-core VMEM)


def _pick_band_h(H, W, band_h=None, target_pixels=1024):
    """Row-band height that divides H; prefer an even band count (v7x megacore)."""
    divisors = [d for d in range(1, H + 1) if H % d == 0]
    if band_h is not None:
        return max(d for d in divisors if d <= max(1, band_h))
    fitting = [d for d in divisors if d * W <= target_pixels] or [1]
    even = [d for d in fitting if (H // d) % 2 == 0]
    return max(even) if even else max(fitting)


# ----------------------------- Pallas kernel -------------------------------- #

def _fused_modconv_kernel(sc_ref, sh_ref, xc_ref, xh_ref, modw_ref, modb_ref, w2_ref,
                          o_ref, *, k, pad, band_h, w_out, wp8, cin_real, demodulate, eps):
    # sc_ref/xc_ref: (band_h,   Wp8, S_p / Cin_p)  bf16   core band (no halo)
    # sh_ref/xh_ref: (2*pad,    Wp8, S_p / Cin_p)  bf16   pad rows above + below the band
    # modw_ref:      (S_p, Cin_p)  bf16   EqualLinear weight.T (scale folded in)
    # modb_ref:      (1, Cin_p)    f32
    # w2_ref:        (K*K, Cin_p, Cout_p) bf16   one (Cin_p, Cout_p) tile per conv tap
    # o_ref:         (band_h, W, Cout_p)
    s_p = sc_ref.shape[-1]
    cin_p = xc_ref.shape[-1]
    out_rows = band_h * wp8
    band_rows = band_h + 2 * pad
    total_rows = band_rows * wp8

    def modulate(style_block, x_block):
        rows = style_block.shape[0] * wp8
        st = style_block.reshape(rows, s_p)
        s = jnp.dot(st, modw_ref[...], preferred_element_type=jnp.float32)
        s = s + modb_ref[...]
        if demodulate:
            # normalize_2nd_moment over the *real* Cin lanes.  Padded lanes of s are exactly
            # zero because BOTH mod weight and mod bias are zero-padded in the wrapper (never
            # pad the bias with bias_init=1), so the full-lane sum equals the real-lane sum.
            # TODO(synk): if the XLU ever binds (v6e), this cross-lane reduce can move to the
            #             MXU as (s*s) @ ones((cin_p, 1)).
            ssq = jnp.sum(s * s, axis=1, keepdims=True)
            s = s * lax.rsqrt(ssq * (1.0 / cin_real) + eps)
        xm = x_block.reshape(rows, cin_p).astype(jnp.float32) * s
        return xm.astype(jnp.bfloat16)

    # ---- per-pixel style modulation (core band + thin halos) ----
    xm_core = modulate(sc_ref[...], xc_ref[...])
    if pad > 0:
        xm_halo = modulate(sh_ref[...], xh_ref[...])
        pieces = [xm_halo[: pad * wp8], xm_core, xm_halo[pad * wp8:]]
    else:
        pieces = [xm_core]
    if k > 1:
        # Zero row-extension so the per-kx shifted operand never wraps (the shifted-in rows
        # only ever land in the discarded alignment columns >= W anyway).
        pieces.append(jnp.zeros((_round_up(k - 1, 8), cin_p), jnp.bfloat16))
    xm_ext = jnp.concatenate(pieces, axis=0) if len(pieces) > 1 else pieces[0]

    # ---- KxK conv as K*K accumulated matmuls (no im2col buffer) ----
    # One full-width shifted operand per kx (static-offset slice ~ XLU shift, like
    # pltpu.roll); each is reused for all K row offsets via *aligned* slices.
    acc = None
    for kx in range(k):
        xk = xm_ext[kx: kx + total_rows, :]
        for ky in range(k):
            tap = xk[ky * wp8: ky * wp8 + out_rows, :]
            part = jnp.dot(tap, w2_ref[ky * k + kx], preferred_element_type=jnp.float32)
            acc = part if acc is None else acc + part

    out = acc.reshape(band_h, wp8, -1)[:, :w_out, :]
    o_ref[...] = out.astype(o_ref.dtype)


# ------------------------------ JAX wrapper --------------------------------- #

def spatial_modulated_conv2d(x_nchw, style_nchw, params, *, demodulate=True, band_h=None,
                             out_layout="NCHW", out_dtype=None):
    """Forward pass of SpatialModulatedConv2d (spatial_style=True, no up/downsample)."""
    # TODO(synk): upsample/downsample branches (Blur + strided / transposed conv) not implemented.
    # TODO(synk): dict-valued spatial style (masks/textures) and the non-spatial per-image
    #             style path (per-sample dcoefs) not implemented.
    # TODO(synk): tiny-Cout layers (e.g. toRGB, Cout=3) waste most of the padded MXU N dim
    #             here; route those through a channel-packed path or plain XLA.
    eps = 1e-8
    weight = params["weight"]       # (1, O, I, K, K)   ~ torch.randn
    mod_w = params["mod_weight"]    # (I, S)            ~ torch.randn (EqualLinear.weight)
    mod_b = params["mod_bias"]      # (I,)              = 1 (bias_init=1)

    B, Cin, H, W = x_nchw.shape
    assert H == W                   # module asserts square inputs
    _, Cout, I, K, _ = weight.shape
    S = mod_w.shape[1]
    assert I == Cin
    assert K % 2 == 1
    pad = K // 2
    KK = K * K
    out_dtype = x_nchw.dtype if out_dtype is None else out_dtype

    # Generation-aware band sizing: bigger bands where VMEM allows it (v5e/v6e: 128 MiB).
    vmem_cap = _vmem_capacity_bytes()
    target_pixels = 4096 if vmem_cap >= 100 * 2**20 else 1024
    band_h = _pick_band_h(H, W, band_h, target_pixels)
    nbands = H // band_h
    band_rows = band_h + 2 * pad
    halo_rows = 2 * pad if pad > 0 else 2          # dummy (unused) halo when K == 1

    # lane-dense channel padding + sublane-aligned padded width
    Cin_p = _round_up(Cin, 128)
    Cout_p = _round_up(Cout, 128)
    S_p = _round_up(S, 128)
    Wp8 = _round_up(W + 2 * pad, 8)

    # glue: bilinear resize of the spatial style map (F.interpolate, align_corners=False)
    if style_nchw.shape[2:] != (H, W):
        style_nchw = jax.image.resize(style_nchw.astype(jnp.float32), (B, S, H, W),
                                      method="bilinear")

    def to_nhwc_padded(a_nchw, c, c_p):
        a = jnp.transpose(a_nchw.astype(jnp.float32), (0, 2, 3, 1))
        a = jnp.pad(a, ((0, 0), (0, 0), (pad, Wp8 - W - pad), (0, c_p - c)))
        return a.astype(jnp.bfloat16)               # (B, H, Wp8, c_p)

    x_nhwc = to_nhwc_padded(x_nchw, Cin, Cin_p)
    s_nhwc = to_nhwc_padded(style_nchw, S, S_p)

    # Core bands: a FREE reshape of the single padded NHWC copy (no duplicated band gather).
    x_core = x_nhwc.reshape(B, nbands, band_h, Wp8, Cin_p)
    s_core = s_nhwc.reshape(B, nbands, band_h, Wp8, S_p)

    # Thin halo rows (pad above + pad below each band), zeroed outside the image.
    if pad > 0:
        r = jnp.arange(nbands)[:, None]
        top_idx = r * band_h - pad + jnp.arange(pad)[None, :]
        bot_idx = (r + 1) * band_h + jnp.arange(pad)[None, :]
        halo_idx = jnp.concatenate([top_idx, bot_idx], axis=1)       # (nbands, 2*pad)
        valid = (halo_idx >= 0) & (halo_idx < H)
        clamped = jnp.clip(halo_idx, 0, H - 1)

        def gather_halo(a):
            g = a[:, clamped]                                        # (B, nbands, 2*pad, Wp8, c)
            return jnp.where(valid[None, :, :, None, None], g, jnp.zeros((), g.dtype))

        x_halo = gather_halo(x_nhwc)
        s_halo = gather_halo(s_nhwc)
    else:
        x_halo = jnp.zeros((B, nbands, halo_rows, Wp8, Cin_p), jnp.bfloat16)
        s_halo = jnp.zeros((B, nbands, halo_rows, Wp8, S_p), jnp.bfloat16)

    # modulation weights: EqualLinear scale folded in, zero-padded (bias MUST be zero-padded
    # so the demod lane-sum stays exact), bf16 for the MXU.
    mod_w_t = (mod_w.astype(jnp.float32) * (1.0 / math.sqrt(S))).T           # (S, Cin)
    mod_w_p = jnp.pad(mod_w_t, ((0, S_p - S), (0, Cin_p - Cin))).astype(jnp.bfloat16)
    mod_b_p = jnp.pad(mod_b.astype(jnp.float32), (0, Cin_p - Cin)).reshape(1, Cin_p)

    # conv weights: fan-in scale + hoisted weight demodulation folded in; one (Cin_p, Cout_p)
    # tile per tap so the kernel runs K*K accumulated matmuls.
    w = weight[0].astype(jnp.float32) * (1.0 / math.sqrt(Cin * K * K))       # (O, I, K, K)
    if demodulate:
        demod = lax.rsqrt(jnp.sum(w * w, axis=(1, 2, 3)) + eps)              # (O,)
        w = w * demod[:, None, None, None]
    w_t = jnp.transpose(w, (2, 3, 1, 0))                                     # (K, K, I, O)
    w_t = jnp.pad(w_t, ((0, 0), (0, 0), (0, Cin_p - Cin), (0, Cout_p - Cout)))
    w2 = w_t.reshape(KK, Cin_p, Cout_p).astype(jnp.bfloat16)

    # VMEM budget (single-counted; x2 only on the double-buffered band inputs / output).
    out_isz = jnp.dtype(out_dtype).itemsize
    in_core_b = band_h * Wp8 * (Cin_p + S_p) * 2
    in_halo_b = halo_rows * Wp8 * (Cin_p + S_p) * 2
    out_b = band_h * W * Cout_p * out_isz
    weight_b = (S_p * Cin_p + KK * Cin_p * Cout_p) * 2 + Cin_p * 4
    temp_b = (band_h * Wp8 * Cin_p * 4                 # s (f32) for the core modulation
              + 2 * band_rows * Wp8 * Cin_p * 2        # xm_ext + one live shifted copy (bf16)
              + 2 * band_h * Wp8 * Cout_p * 4)         # f32 accumulator + one matmul result
    step_bytes = 2 * (in_core_b + in_halo_b + out_b) + 2 * weight_b + temp_b
    vmem_limit = int(min(max(int(1.5 * step_bytes), 48 * 2**20), int(0.85 * vmem_cap)))

    def _resident_spec(block_shape, index_map):
        # Grid-invariant operands: single-buffer (no point double-buffering weights whose
        # block never changes).  Fall back silently if this JAX lacks pipeline_mode/Buffered.
        if hasattr(pl, "Buffered"):
            try:
                return pl.BlockSpec(block_shape, index_map, pipeline_mode=pl.Buffered(1))
            except (TypeError, ValueError):
                pass
        return pl.BlockSpec(block_shape, index_map)

    kern = functools.partial(
        _fused_modconv_kernel, k=K, pad=pad, band_h=band_h, w_out=W, wp8=Wp8,
        cin_real=Cin, demodulate=demodulate, eps=eps)

    out_banded = pl.pallas_call(
        kern,
        out_shape=jax.ShapeDtypeStruct((B, nbands, band_h, W, Cout_p), out_dtype),
        grid=(B, nbands),
        in_specs=[
            pl.BlockSpec((None, None, band_h, Wp8, S_p), lambda b, r: (b, r, 0, 0, 0)),
            pl.BlockSpec((None, None, halo_rows, Wp8, S_p), lambda b, r: (b, r, 0, 0, 0)),
            pl.BlockSpec((None, None, band_h, Wp8, Cin_p), lambda b, r: (b, r, 0, 0, 0)),
            pl.BlockSpec((None, None, halo_rows, Wp8, Cin_p), lambda b, r: (b, r, 0, 0, 0)),
            _resident_spec((S_p, Cin_p), lambda b, r: (0, 0)),
            _resident_spec((1, Cin_p), lambda b, r: (0, 0)),
            _resident_spec((KK, Cin_p, Cout_p), lambda b, r: (0, 0, 0)),
        ],
        out_specs=pl.BlockSpec((None, None, band_h, W, Cout_p), lambda b, r: (b, r, 0, 0, 0)),
        compiler_params=pltpu.CompilerParams(
            dimension_semantics=("parallel", "parallel"),
            vmem_limit_bytes=vmem_limit),
    )(s_core, s_halo, x_core, x_halo, mod_w_p, mod_b_p, w2)

    out_nhwc = out_banded.reshape(B, H, W, Cout_p)[..., :Cout]
    if out_layout == "NHWC":
        return out_nhwc                               # skip the NCHW epilogue pass if allowed
    return jnp.transpose(out_nhwc, (0, 3, 1, 2))      # NCHW out (module semantics)


# ---------------------------- pure-JAX reference ----------------------------- #

def reference(x_nchw, style_nchw, params, demodulate=True):
    eps = 1e-8
    w_raw = params["weight"][0]
    mod_w, mod_b = params["mod_weight"], params["mod_bias"]
    B, Cin, H, W = x_nchw.shape
    O, _, K, _ = w_raw.shape
    S = mod_w.shape[1]
    if style_nchw.shape[2:] != (H, W):
        style_nchw = jax.image.resize(style_nchw, (B, S, H, W), method="bilinear")
    s = jnp.transpose(style_nchw, (0, 2, 3, 1)).reshape(-1, S) @ (mod_w / math.sqrt(S)).T + mod_b
    s = jnp.transpose(s.reshape(B, H, W, Cin), (0, 3, 1, 2))
    if demodulate:
        s = s * lax.rsqrt(jnp.mean(s * s, axis=1, keepdims=True) + eps)
    w = w_raw / math.sqrt(Cin * K * K)
    xm = x_nchw * s
    if demodulate:
        demod = lax.rsqrt(jnp.sum(w * w, axis=(1, 2, 3)) + eps)
        w = w * demod[:, None, None, None]
    return lax.conv_general_dilated(
        xm, w, window_strides=(1, 1), padding=((K // 2, K // 2),) * 2,
        dimension_numbers=("NCHW", "OIHW", "NCHW"))


# ---------------------------------- main ------------------------------------- #

if __name__ == "__main__":
    B, Cin, Cout, K, S, H = 2, 8, 16, 3, 32, 16
    key = jax.random.PRNGKey(0)
    k1, k2, k3, k4 = jax.random.split(key, 4)

    params = {
        "weight": jax.random.normal(k1, (1, Cout, Cin, K, K), jnp.float32),
        "mod_weight": jax.random.normal(k2, (Cin, S), jnp.float32),
        "mod_bias": jnp.ones((Cin,), jnp.float32),   # bias_init = 1
    }
    x = jax.random.normal(k3, (B, Cin, H, H), jnp.float32)
    style = jax.random.normal(k4, (B, S, 8, 8), jnp.float32)   # low-res spatial style map

    # band_h=4 deliberately exercises multiple row bands + halo stitching at this toy size;
    # the default (band_h=None) auto-sizes bands per generation for real shapes.
    fwd = jax.jit(functools.partial(spatial_modulated_conv2d, demodulate=True, band_h=4))
    out = jax.block_until_ready(fwd(x, style, params))

    ref = reference(x, style, params, demodulate=True)
    # bf16 MXU operands -> compare to the f32 reference with bf16-level tolerances;
    # accumulation and all elementwise math stay f32.
    np.testing.assert_allclose(np.asarray(out), np.asarray(ref), rtol=3e-2, atol=3e-2)
    assert out.shape == (B, Cout, H, H)
    print("KERNEL_OK")
</pallas_src>

<mosaic_0001>
module attributes {stable_mosaic.version = 11 : i64} {
  func.func @_fused_modconv_kernel(%arg0: i32, %arg1: i32, %arg2: memref<1x1x4x24x128xbf16, #tpu.memory_space<vmem>>, %arg3: memref<1x1x2x24x128xbf16, #tpu.memory_space<vmem>>, %arg4: memref<1x1x4x24x128xbf16, #tpu.memory_space<vmem>>, %arg5: memref<1x1x2x24x128xbf16, #tpu.memory_space<vmem>>, %arg6: memref<128x128xbf16, #tpu.memory_space<vmem>>, %arg7: memref<1x128xf32, #tpu.memory_space<vmem>>, %arg8: memref<9x128x128xbf16, #tpu.memory_space<vmem>>, %arg9: memref<1x1x4x16x128xf32, #tpu.memory_space<vmem>>) attributes {dimension_semantics = [#tpu.dimension_semantics<parallel>, #tpu.dimension_semantics<parallel>], iteration_bounds = array<i64: 2, 4>, scalar_prefetch = 0 : i64, scratch_operands = 0 : i64, tpu.core_type = #tpu.core_type<tc>, window_params = [{transform_indices = @transform_0, window_bounds = array<i64: 1, 1, 4, 24, 128>}, {transform_indices = @transform_1, window_bounds = array<i64: 1, 1, 2, 24, 128>}, {transform_indices = @transform_2, window_bounds = array<i64: 1, 1, 4, 24, 128>}, {transform_indices = @transform_3, window_bounds = array<i64: 1, 1, 2, 24, 128>}, {pipeline_mode = #tpu.pipeline_mode<synchronous>, transform_indices = @transform_4, window_bounds = array<i64: 128, 128>}, {pipeline_mode = #tpu.pipeline_mode<synchronous>, transform_indices = @transform_5, window_bounds = array<i64: 1, 128>}, {pipeline_mode = #tpu.pipeline_mode<synchronous>, transform_indices = @transform_6, window_bounds = array<i64: 9, 128, 128>}, {transform_indices = @transform_7, window_bounds = array<i64: 1, 1, 4, 16, 128>}]} {
    %c0 = arith.constant 0 : index
    %c0_0 = arith.constant 0 : index
    %c0_1 = arith.constant 0 : index
    %c0_2 = arith.constant 0 : index
    %c0_3 = arith.constant 0 : index
    %0 = vector.load %arg2[%c0, %c0_0, %c0_1, %c0_2, %c0_3] : memref<1x1x4x24x128xbf16, #tpu.memory_space<vmem>>, vector<1x1x4x24x128xbf16>
    %1 = vector.shape_cast %0 : vector<1x1x4x24x128xbf16> to vector<4x24x128xbf16>
    %c0_4 = arith.constant 0 : index
    %c0_5 = arith.constant 0 : index
    %c0_6 = arith.constant 0 : index
    %c0_7 = arith.constant 0 : index
    %c0_8 = arith.constant 0 : index
    %2 = vector.load %arg4[%c0_4, %c0_5, %c0_6, %c0_7, %c0_8] : memref<1x1x4x24x128xbf16, #tpu.memory_space<vmem>>, vector<1x1x4x24x128xbf16>
    %3 = vector.shape_cast %2 : vector<1x1x4x24x128xbf16> to vector<4x24x128xbf16>
    %4 = vector.shape_cast %1 : vector<4x24x128xbf16> to vector<96x128xbf16>
    %c0_9 = arith.constant 0 : index
    %c0_10 = arith.constant 0 : index
    %5 = vector.load %arg6[%c0_9, %c0_10] : memref<128x128xbf16, #tpu.memory_space<vmem>>, vector<128x128xbf16>
    %cst = arith.constant dense<0.000000e+00> : vector<96x128xf32>
    %6 = tpu.matmul %4, %5, %cst {dimension_numbers = #tpu.dot_dimension_numbers<[1], [0], [0], [1], [0, 0, 1, 1], [], []>} : vector<96x128xbf16>, vector<128x128xbf16>, vector<96x128xf32> -> vector<96x128xf32>
    %c0_11 = arith.constant 0 : index
    %c0_12 = arith.constant 0 : index
    %7 = vector.load %arg7[%c0_11, %c0_12] : memref<1x128xf32, #tpu.memory_space<vmem>>, vector<1x128xf32>
    %8 = vector.broadcast %7 : vector<1x128xf32> to vector<96x128xf32>
    %9 = arith.addf %6, %8 : vector<96x128xf32>
    %10 = arith.mulf %9, %9 : vector<96x128xf32>
    %cst_13 = arith.constant dense<0.000000e+00> : vector<96xf32>
    %11 = vector.multi_reduction <add>, %10, %cst_13 [1] : vector<96x128xf32> to vector<96xf32>
    %12 = vector.shape_cast %11 : vector<96xf32> to vector<96x1xf32>
    %cst_14 = arith.constant 1.250000e-01 : f32
    %13 = vector.broadcast %cst_14 : f32 to vector<96x1xf32>
    %14 = arith.mulf %12, %13 : vector<96x1xf32>
    %cst_15 = arith.constant 9.99999993E-9 : f32
    %15 = vector.broadcast %cst_15 : f32 to vector<96x1xf32>
    %16 = arith.addf %14, %15 : vector<96x1xf32>
    %17 = math.rsqrt %16 : vector<96x1xf32>
    %18 = vector.broadcast %17 : vector<96x1xf32> to vector<96x128xf32>
    %19 = arith.mulf %9, %18 : vector<96x128xf32>
    %20 = vector.shape_cast %3 : vector<4x24x128xbf16> to vector<96x128xbf16>
    %21 = arith.extf %20 : vector<96x128xbf16> to vector<96x128xf32>
    %22 = arith.mulf %21, %19 : vector<96x128xf32>
    %23 = arith.truncf %22 : vector<96x128xf32> to vector<96x128xbf16>
    %c0_16 = arith.constant 0 : index
    %c0_17 = arith.constant 0 : index
    %c0_18 = arith.constant 0 : index
    %c0_19 = arith.constant 0 : index
    %c0_20 = arith.constant 0 : index
    %24 = vector.load %arg3[%c0_16, %c0_17, %c0_18, %c0_19, %c0_20] : memref<1x1x2x24x128xbf16, #tpu.memory_space<vmem>>, vector<1x1x2x24x128xbf16>
    %25 = vector.shape_cast %24 : vector<1x1x2x24x128xbf16> to vector<2x24x128xbf16>
    %c0_21 = arith.constant 0 : index
    %c0_22 = arith.constant 0 : index
    %c0_23 = arith.constant 0 : index
    %c0_24 = arith.constant 0 : index
    %c0_25 = arith.constant 0 : index
    %26 = vector.load %arg5[%c0_21, %c0_22, %c0_23, %c0_24, %c0_25] : memref<1x1x2x24x128xbf16, #tpu.memory_space<vmem>>, vector<1x1x2x24x128xbf16>
    %27 = vector.shape_cast %26 : vector<1x1x2x24x128xbf16> to vector<2x24x128xbf16>
    %28 = vector.shape_cast %25 : vector<2x24x128xbf16> to vector<48x128xbf16>
    %c0_26 = arith.constant 0 : index
    %c0_27 = arith.constant 0 : index
    %29 = vector.load %arg6[%c0_26, %c0_27] : memref<128x128xbf16, #tpu.memory_space<vmem>>, vector<128x128xbf16>
    %cst_28 = arith.constant dense<0.000000e+00> : vector<48x128xf32>
    %30 = tpu.matmul %28, %29, %cst_28 {dimension_numbers = #tpu.dot_dimension_numbers<[1], [0], [0], [1], [0, 0, 1, 1], [], []>} : vector<48x128xbf16>, vector<128x128xbf16>, vector<48x128xf32> -> vector<48x128xf32>
    %c0_29 = arith.constant 0 : index
    %c0_30 = arith.constant 0 : index
    %31 = vector.load %arg7[%c0_29, %c0_30] : memref<1x128xf32, #tpu.memory_space<vmem>>, vector<1x128xf32>
    %32 = vector.broadcast %31 : vector<1x128xf32> to vector<48x128xf32>
    %33 = arith.addf %30, %32 : vector<48x128xf32>
    %34 = arith.mulf %33, %33 : vector<48x128xf32>
    %cst_31 = arith.constant dense<0.000000e+00> : vector<48xf32>
    %35 = vector.multi_reduction <add>, %34, %cst_31 [1] : vector<48x128xf32> to vector<48xf32>
    %36 = vector.shape_cast %35 : vector<48xf32> to vector<48x1xf32>
    %cst_32 = arith.constant 1.250000e-01 : f32
    %37 = vector.broadcast %cst_32 : f32 to vector<48x1xf32>
    %38 = arith.mulf %36, %37 : vector<48x1xf32>
    %cst_33 = arith.constant 9.99999993E-9 : f32
    %39 = vector.broadcast %cst_33 : f32 to vector<48x1xf32>
    %40 = arith.addf %38, %39 : vector<48x1xf32>
    %41 = math.rsqrt %40 : vector<48x1xf32>
    %42 = vector.broadcast %41 : vector<48x1xf32> to vector<48x128xf32>
    %43 = arith.mulf %33, %42 : vector<48x128xf32>
    %44 = vector.shape_cast %27 : vector<2x24x128xbf16> to vector<48x128xbf16>
    %45 = arith.extf %44 : vector<48x128xbf16> to vector<48x128xf32>
    %46 = arith.mulf %45, %43 : vector<48x128xf32>
    %47 = arith.truncf %46 : vector<48x128xf32> to vector<48x128xbf16>
    %48 = vector.extract_strided_slice %47 {offsets = [0, 0], sizes = [24, 128], strides = [1, 1]} : vector<48x128xbf16> to vector<24x128xbf16>
    %49 = vector.extract_strided_slice %47 {offsets = [24, 0], sizes = [24, 128], strides = [1, 1]} : vector<48x128xbf16> to vector<24x128xbf16>
    %cst_34 = arith.constant 0.000000e+00 : bf16
    %50 = vector.broadcast %cst_34 : bf16 to vector<8x128xbf16>
    %51 = tpu.concatenate %48, %23, %49, %50 in 0 : vector<24x128xbf16>, vector<96x128xbf16>, vector<24x128xbf16>, vector<8x128xbf16> -> vector<152x128xbf16>
    %52 = vector.extract_strided_slice %51 {offsets = [0, 0], sizes = [144, 128], strides = [1, 1]} : vector<152x128xbf16> to vector<144x128xbf16>
    %53 = vector.extract_strided_slice %52 {offsets = [0, 0], sizes = [96, 128], strides = [1, 1]} : vector<144x128xbf16> to vector<96x128xbf16>
    %c0_35 = arith.constant 0 : index
    %c0_36 = arith.constant 0 : index
    %c0_37 = arith.constant 0 : index
    %54 = vector.load %arg8[%c0_35, %c0_36, %c0_37] : memref<9x128x128xbf16, #tpu.memory_space<vmem>>, vector<1x128x128xbf16>
    %55 = vector.shape_cast %54 : vector<1x128x128xbf16> to vector<128x128xbf16>
    %cst_38 = arith.constant dense<0.000000e+00> : vector<96x128xf32>
    %56 = tpu.matmul %53, %55, %cst_38 {dimension_numbers = #tpu.dot_dimension_numbers<[1], [0], [0], [1], [0, 0, 1, 1], [], []>} : vector<96x128xbf16>, vector<128x128xbf16>, vector<96x128xf32> -> vector<96x128xf32>
    %57 = vector.extract_strided_slice %52 {offsets = [24, 0], sizes = [96, 128], strides = [1, 1]} : vector<144x128xbf16> to vector<96x128xbf16>
    %c3 = arith.constant 3 : index
    %c0_39 = arith.constant 0 : index
    %c0_40 = arith.constant 0 : index
    %58 = vector.load %arg8[%c3, %c0_39, %c0_40] : memref<9x128x128xbf16, #tpu.memory_space<vmem>>, vector<1x128x128xbf16>
    %59 = vector.shape_cast %58 : vector<1x128x128xbf16> to vector<128x128xbf16>
    %cst_41 = arith.constant dense<0.000000e+00> : vector<96x128xf32>
    %60 = tpu.matmul %57, %59, %cst_41 {dimension_numbers = #tpu.dot_dimension_numbers<[1], [0], [0], [1], [0, 0, 1, 1], [], []>} : vector<96x128xbf16>, vector<128x128xbf16>, vector<96x128xf32> -> vector<96x128xf32>
    %61 = arith.addf %56, %60 : vector<96x128xf32>
    %62 = vector.extract_strided_slice %52 {offsets = [48, 0], sizes = [96, 128], strides = [1, 1]} : vector<144x128xbf16> to vector<96x128xbf16>
    %c6 = arith.constant 6 : index
    %c0_42 = arith.constant 0 : index
    %c0_43 = arith.constant 0 : index
    %63 = vector.load %arg8[%c6, %c0_42, %c0_43] : memref<9x128x128xbf16, #tpu.memory_space<vmem>>, vector<1x128x128xbf16>
    %64 = vector.shape_cast %63 : vector<1x128x128xbf16> to vector<128x128xbf16>
    %cst_44 = arith.constant dense<0.000000e+00> : vector<96x128xf32>
    %65 = tpu.matmul %62, %64, %cst_44 {dimension_numbers = #tpu.dot_dimension_numbers<[1], [0], [0], [1], [0, 0, 1, 1], [], []>} : vector<96x128xbf16>, vector<128x128xbf16>, vector<96x128xf32> -> vector<96x128xf32>
    %66 = arith.addf %61, %65 : vector<96x128xf32>
    %67 = vector.extract_strided_slice %51 {offsets = [1, 0], sizes = [144, 128], strides = [1, 1]} : vector<152x128xbf16> to vector<144x128xbf16>
    %68 = vector.extract_strided_slice %67 {offsets = [0, 0], sizes = [96, 128], strides = [1, 1]} : vector<144x128xbf16> to vector<96x128xbf16>
    %c1 = arith.constant 1 : index
    %c0_45 = arith.constant 0 : index
    %c0_46 = arith.constant 0 : index
    %69 = vector.load %arg8[%c1, %c0_45, %c0_46] : memref<9x128x128xbf16, #tpu.memory_space<vmem>>, vector<1x128x128xbf16>
    %70 = vector.shape_cast %69 : vector<1x128x128xbf16> to vector<128x128xbf16>
    %cst_47 = arith.constant dense<0.000000e+00> : vector<96x128xf32>
    %71 = tpu.matmul %68, %70, %cst_47 {dimension_numbers = #tpu.dot_dimension_numbers<[1], [0], [0], [1], [0, 0, 1, 1], [], []>} : vector<96x128xbf16>, vector<128x128xbf16>, vector<96x128xf32> -> vector<96x128xf32>
    %72 = arith.addf %66, %71 : vector<96x128xf32>
    %73 = vector.extract_strided_slice %67 {offsets = [24, 0], sizes = [96, 128], strides = [1, 1]} : vector<144x128xbf16> to vector<96x128xbf16>
    %c4 = arith.constant 4 : index
    %c0_48 = arith.constant 0 : index
    %c0_49 = arith.constant 0 : index
    %74 = vector.load %arg8[%c4, %c0_48, %c0_49] : memref<9x128x128xbf16, #tpu.memory_space<vmem>>, vector<1x128x128xbf16>
    %75 = vector.shape_cast %74 : vector<1x128x128xbf16> to vector<128x128xbf16>
    %cst_50 = arith.constant dense<0.000000e+00> : vector<96x128xf32>
    %76 = tpu.matmul %73, %75, %cst_50 {dimension_numbers = #tpu.dot_dimension_numbers<[1], [0], [0], [1], [0, 0, 1, 1], [], []>} : vector<96x128xbf16>, vector<128x128xbf16>, vector<96x128xf32> -> vector<96x128xf32>
    %77 = arith.addf %72, %76 : vector<96x128xf32>
    %78 = vector.extract_strided_slice %67 {offsets = [48, 0], sizes = [96, 128], strides = [1, 1]} : vector<144x128xbf16> to vector<96x128xbf16>
    %c7 = arith.constant 7 : index
    %c0_51 = arith.constant 0 : index
    %c0_52 = arith.constant 0 : index
    %79 = vector.load %arg8[%c7, %c0_51, %c0_52] : memref<9x128x128xbf16, #tpu.memory_space<vmem>>, vector<1x128x128xbf16>
    %80 = vector.shape_cast %79 : vector<1x128x128xbf16> to vector<128x128xbf16>
    %cst_53 = arith.constant dense<0.000000e+00> : vector<96x128xf32>
    %81 = tpu.matmul %78, %80, %cst_53 {dimension_numbers = #tpu.dot_dimension_numbers<[1], [0], [0], [1], [0, 0, 1, 1], [], []>} : vector<96x128xbf16>, vector<128x128xbf16>, vector<96x128xf32> -> vector<96x128xf32>
    %82 = arith.addf %77, %81 : vector<96x128xf32>
    %83 = vector.extract_strided_slice %51 {offsets = [2, 0], sizes = [144, 128], strides = [1, 1]} : vector<152x128xbf16> to vector<144x128xbf16>
    %84 = vector.extract_strided_slice %83 {offsets = [0, 0], sizes = [96, 128], strides = [1, 1]} : vector<144x128xbf16> to vector<96x128xbf16>
    %c2 = arith.constant 2 : index
    %c0_54 = arith.constant 0 : index
    %c0_55 = arith.constant 0 : index
    %85 = vector.load %arg8[%c2, %c0_54, %c0_55] : memref<9x128x128xbf16, #tpu.memory_space<vmem>>, vector<1x128x128xbf16>
    %86 = vector.shape_cast %85 : vector<1x128x128xbf16> to vector<128x128xbf16>
    %cst_56 = arith.constant dense<0.000000e+00> : vector<96x128xf32>
    %87 = tpu.matmul %84, %86, %cst_56 {dimension_numbers = #tpu.dot_dimension_numbers<[1], [0], [0], [1], [0, 0, 1, 1], [], []>} : vector<96x128xbf16>, vector<128x128xbf16>, vector<96x128xf32> -> vector<96x128xf32>
    %88 = arith.addf %82, %87 : vector<96x128xf32>
    %89 = vector.extract_strided_slice %83 {offsets = [24, 0], sizes = [96, 128], strides = [1, 1]} : vector<144x128xbf16> to vector<96x128xbf16>
    %c5 = arith.constant 5 : index
    %c0_57 = arith.constant 0 : index
    %c0_58 = arith.constant 0 : index
    %90 = vector.load %arg8[%c5, %c0_57, %c0_58] : memref<9x128x128xbf16, #tpu.memory_space<vmem>>, vector<1x128x128xbf16>
    %91 = vector.shape_cast %90 : vector<1x128x128xbf16> to vector<128x128xbf16>
    %cst_59 = arith.constant dense<0.000000e+00> : vector<96x128xf32>
    %92 = tpu.matmul %89, %91, %cst_59 {dimension_numbers = #tpu.dot_dimension_numbers<[1], [0], [0], [1], [0, 0, 1, 1], [], []>} : vector<96x128xbf16>, vector<128x128xbf16>, vector<96x128xf32> -> vector<96x128xf32>
    %93 = arith.addf %88, %92 : vector<96x128xf32>
    %94 = vector.extract_strided_slice %83 {offsets = [48, 0], sizes = [96, 128], strides = [1, 1]} : vector<144x128xbf16> to vector<96x128xbf16>
    %c8 = arith.constant 8 : index
    %c0_60 = arith.constant 0 : index
    %c0_61 = arith.constant 0 : index
    %95 = vector.load %arg8[%c8, %c0_60, %c0_61] : memref<9x128x128xbf16, #tpu.memory_space<vmem>>, vector<1x128x128xbf16>
    %96 = vector.shape_cast %95 : vector<1x128x128xbf16> to vector<128x128xbf16>
    %cst_62 = arith.constant dense<0.000000e+00> : vector<96x128xf32>
    %97 = tpu.matmul %94, %96, %cst_62 {dimension_numbers = #tpu.dot_dimension_numbers<[1], [0], [0], [1], [0, 0, 1, 1], [], []>} : vector<96x128xbf16>, vector<128x128xbf16>, vector<96x128xf32> -> vector<96x128xf32>
    %98 = arith.addf %93, %97 : vector<96x128xf32>
    %99 = vector.shape_cast %98 : vector<96x128xf32> to vector<4x24x128xf32>
    %100 = vector.extract_strided_slice %99 {offsets = [0, 0, 0], sizes = [4, 16, 128], strides = [1, 1, 1]} : vector<4x24x128xf32> to vector<4x16x128xf32>
    %c0_63 = arith.constant 0 : index
    %c0_64 = arith.constant 0 : index
    %c0_65 = arith.constant 0 : index
    %c0_66 = arith.constant 0 : index
    %c0_67 = arith.constant 0 : index
    %101 = vector.load %arg9[%c0_63, %c0_64, %c0_65, %c0_66, %c0_67] : memref<1x1x4x16x128xf32, #tpu.memory_space<vmem>>, vector<1x1x4x16x128xf32>
    %102 = vector.shape_cast %101 : vector<1x1x4x16x128xf32> to vector<4x16x128xf32>
    %103 = vector.shape_cast %100 : vector<4x16x128xf32> to vector<1x1x4x16x128xf32>
    tpu.vector_store %arg9[%c0_63, %c0_64, %c0_65, %c0_66, %c0_67], %103 {strides = array<i32>} : memref<1x1x4x16x128xf32, #tpu.memory_space<vmem>>, vector<1x1x4x16x128xf32>,
    return
  }
  func.func @transform_0(%arg0: i32, %arg1: i32) -> (i32, i32, i32, i32, i32) {
    %c0_i32 = arith.constant 0 : i32
    %c0_i32_0 = arith.constant 0 : i32
    %c0_i32_1 = arith.constant 0 : i32
    %c0_i32_2 = arith.constant 0 : i32
    return %arg0, %arg1, %c0_i32, %c0_i32_0, %c0_i32_1 : i32, i32, i32, i32, i32
  }
  func.func @transform_1(%arg0: i32, %arg1: i32) -> (i32, i32, i32, i32, i32) {
    %c0_i32 = arith.constant 0 : i32
    %c0_i32_0 = arith.constant 0 : i32
    %c0_i32_1 = arith.constant 0 : i32
    %c0_i32_2 = arith.constant 0 : i32
    return %arg0, %arg1, %c0_i32, %c0_i32_0, %c0_i32_1 : i32, i32, i32, i32, i32
  }
  func.func @transform_2(%arg0: i32, %arg1: i32) -> (i32, i32, i32, i32, i32) {
    %c0_i32 = arith.constant 0 : i32
    %c0_i32_0 = arith.constant 0 : i32
    %c0_i32_1 = arith.constant 0 : i32
    %c0_i32_2 = arith.constant 0 : i32
    return %arg0, %arg1, %c0_i32, %c0_i32_0, %c0_i32_1 : i32, i32, i32, i32, i32
  }
  func.func @transform_3(%arg0: i32, %arg1: i32) -> (i32, i32, i32, i32, i32) {
    %c0_i32 = arith.constant 0 : i32
    %c0_i32_0 = arith.constant 0 : i32
    %c0_i32_1 = arith.constant 0 : i32
    %c0_i32_2 = arith.constant 0 : i32
    return %arg0, %arg1, %c0_i32, %c0_i32_0, %c0_i32_1 : i32, i32, i32, i32, i32
  }
  func.func @transform_4(%arg0: i32, %arg1: i32) -> (i32, i32) {
    %c0_i32 = arith.constant 0 : i32
    %c0_i32_0 = arith.constant 0 : i32
    %c0_i32_1 = arith.constant 0 : i32
    return %c0_i32, %c0_i32_0 : i32, i32
  }
  func.func @transform_5(%arg0: i32, %arg1: i32) -> (i32, i32) {
    %c0_i32 = arith.constant 0 : i32
    %c0_i32_0 = arith.constant 0 : i32
    %c0_i32_1 = arith.constant 0 : i32
    return %c0_i32, %c0_i32_0 : i32, i32
  }
  func.func @transform_6(%arg0: i32, %arg1: i32) -> (i32, i32, i32) {
    %c0_i32 = arith.constant 0 : i32
    %c0_i32_0 = arith.constant 0 : i32
    %c0_i32_1 = arith.constant 0 : i32
    %c0_i32_2 = arith.constant 0 : i32
    return %c0_i32, %c0_i32_0, %c0_i32_1 : i32, i32, i32
  }
  func.func @transform_7(%arg0: i32, %arg1: i32) -> (i32, i32, i32, i32, i32) {
    %c0_i32 = arith.constant 0 : i32
    %c0_i32_0 = arith.constant 0 : i32
    %c0_i32_1 = arith.constant 0 : i32
    %c0_i32_2 = arith.constant 0 : i32
    return %arg0, %arg1, %c0_i32, %c0_i32_0, %c0_i32_1 : i32, i32, i32, i32, i32
  }
}

</mosaic_0001>

<llo_original>
// kernel: spatial_modulated_conv2d.1
$region0: #{spatial_modulated_conv2d.1}
  #allocation0 [shape = 'u32[]', space=smem, size = 0x4, offset = 0x4, fixed_abs, tag = 'smem constant byte address 0x4 - core index']
  #allocation1 [shape = 'u32[144,128]{1,0:T(1,128)}', space=vmem, size = 0x12000, scoped, tag = 'internal scratch']
  %s0 = inlined_call_operand.vmem [shape: bf16[2,4,4,24,128], index: 0, kind: input, shape index: {}]
  %s1 = inlined_call_operand.vmem [shape: bf16[2,4,2,24,128], index: 1, kind: input, shape index: {}]
  %s2 = inlined_call_operand.vmem [shape: bf16[2,4,4,24,128], index: 2, kind: input, shape index: {}]
  %s3 = inlined_call_operand.vmem [shape: bf16[2,4,2,24,128], index: 3, kind: input, shape index: {}]
  %s4 = inlined_call_operand.vmem [shape: bf16[128,128], index: 4, kind: input, shape index: {}]
  %s5 = inlined_call_operand.vmem [shape: f32[1,128], index: 5, kind: input, shape index: {}]
  %s6 = inlined_call_operand.vmem [shape: bf16[9,128,128], index: 6, kind: input, shape index: {}]
  %s7 = inlined_call_operand.vmem [shape: f32[2,4,4,16,128], index: 7, kind: output, shape index: {}]
  %s8 = sld [smem:[#allocation0]]
  $region61: #{spatial_modulated_conv2d.1} parent=0
    _
  %s10 = ssub.s32 1, %s8
  %s11 = scalar_select 0, %s10, %s8
  loop: start=0, step=1, limit=10
  $region2: #{spatial_modulated_conv2d.1} parent=0 // loop_pre_header
    _
  $region3: #{spatial_modulated_conv2d.1} parent=0 // loop_header
    %s13 = sphi 0, %s17
    %p14 = scmp.ge.s32.totalorder %s13, 10
    %s20 = sphi 0, %s32
    %s21 = sphi 0, %s28
    %s22 = sphi 0, %s20
    %s23 = sphi 0, %s21
    %s24 = sphi 0, %s22
    %s25 = sphi 0, %s23
    %s37 = sphi 0, %s39
    %s40 = sphi 0, %s37
    %s41 = sphi 0, %s40
    %s57 = sphi 0, %s41
    %s65 = sphi 0, %s67
    %s68 = sphi 0, %s65
    %s69 = sphi 0, %s68
    %s85 = sphi 0, %s69
    %s93 = sphi 0, %s95
    %s96 = sphi 0, %s93
    %s97 = sphi 0, %s96
    %s113 = sphi 0, %s97
    %s121 = sphi 0, %s123
    %s124 = sphi 0, %s121
    %s125 = sphi 0, %s124
    %s141 = sphi 0, %s125
    %s145 = sphi 0, %s145
    %s147 = sphi 0, %s145
    %s148 = sphi 0, %s147
    %s162 = sphi 0, %s148
    %s166 = sphi 0, %s166
    %s168 = sphi 0, %s166
    %s169 = sphi 0, %s168
    %s183 = sphi 0, %s169
    %s187 = sphi 0, %s187
    %s189 = sphi 0, %s187
    %s190 = sphi 0, %s189
    %s204 = sphi 0, %s190
    %s212 = sphi 0, %s214
    %s215 = sphi 0, %s212
    %s216 = sphi 0, %s215
    %s232 = sphi 0, %s216
  $region4: #{spatial_modulated_conv2d.1} parent=0 // loop_header_branch
    %16 = sbr.rel (%p14) target = $region8
  $region5: #{spatial_modulated_conv2d.1} parent=0 // loop_body
    %s18 = ssub.s32 %s13, 1
    %s19 = ssub.s32 %s13, 2
    %s26 = sadd.s32 1, %s21
    %p27 = scmp.ge.s32.totalorder %s26, 4
    %s28 = scalar_select %p27, 0, %s26
    %s29 = sadd.s32 1, %s20
    %s30 = scalar_select %p27, %s29, %s20
    %p31 = scmp.ge.s32.totalorder %s30, 2
    %s32 = scalar_select %p31, 0, %s30
    %s33 = ssub.s32 %s20, %s32
    %s34 = ssub.s32 %s21, %s28
    %s35 = sor.u32 %s33, %s34
    %p36 = scmp.eq.s32.totalorder %s35, 0
    %s38 = sadd.s32 %s37, 1
    %s39 = scalar_select %p36, %s37, %s38
    %p42 = pneg %p36
    %p43 = scmp.eq.s32.totalorder %s13, 7
    %p44 = por %p42, %p43
    %p45 = scmp.ne.s32.totalorder %s37, %s40
    %p46 = scmp.eq.s32.totalorder %s13, 0
    %p47 = por %p45, %p46
    %p48 = scmp.ne.s32.totalorder %s37, %s40
    %p49 = scmp.eq.s32.totalorder %s18, 7
    %p50 = por %p48, %p49
    %p51 = scmp.ne.s32.totalorder %s40, %s41
    %p52 = scmp.eq.s32.totalorder %s18, 0
    %p53 = por %p51, %p52
    %p54 = scmp.ne.s32.totalorder %s40, %s41
    %p55 = scmp.eq.s32.totalorder %s19, 7
    %p56 = por %p54, %p55
    %p58 = scmp.ne.s32.totalorder %s41, %s57
    %p59 = scmp.eq.s32.totalorder %s19, 0
    %p60 = por %p58, %p59
    %s61 = ssub.s32 %s20, %s32
    %s62 = ssub.s32 %s21, %s28
    %s63 = sor.u32 %s61, %s62
    %p64 = scmp.eq.s32.totalorder %s63, 0
    %s66 = sadd.s32 %s65, 1
    %s67 = scalar_select %p64, %s65, %s66
    %p70 = pneg %p64
    %p71 = scmp.eq.s32.totalorder %s13, 7
    %p72 = por %p70, %p71
    %p73 = scmp.ne.s32.totalorder %s65, %s68
    %p74 = scmp.eq.s32.totalorder %s13, 0
    %p75 = por %p73, %p74
    %p76 = scmp.ne.s32.totalorder %s65, %s68
    %p77 = scmp.eq.s32.totalorder %s18, 7
    %p78 = por %p76, %p77
    %p79 = scmp.ne.s32.totalorder %s68, %s69
    %p80 = scmp.eq.s32.totalorder %s18, 0
    %p81 = por %p79, %p80
    %p82 = scmp.ne.s32.totalorder %s68, %s69
    %p83 = scmp.eq.s32.totalorder %s19, 7
    %p84 = por %p82, %p83
    %p86 = scmp.ne.s32.totalorder %s69, %s85
    %p87 = scmp.eq.s32.totalorder %s19, 0
    %p88 = por %p86, %p87
    %s89 = ssub.s32 %s20, %s32
    %s90 = ssub.s32 %s21, %s28
    %s91 = sor.u32 %s89, %s90
    %p92 = scmp.eq.s32.totalorder %s91, 0
    %s94 = sadd.s32 %s93, 1
    %s95 = scalar_select %p92, %s93, %s94
    %p98 = pneg %p92
    %p99 = scmp.eq.s32.totalorder %s13, 7
    %p100 = por %p98, %p99
    %p101 = scmp.ne.s32.totalorder %s93, %s96
    %p102 = scmp.eq.s32.totalorder %s13, 0
    %p103 = por %p101, %p102
    %p104 = scmp.ne.s32.totalorder %s93, %s96
    %p105 = scmp.eq.s32.totalorder %s18, 7
    %p106 = por %p104, %p105
    %p107 = scmp.ne.s32.totalorder %s96, %s97
    %p108 = scmp.eq.s32.totalorder %s18, 0
    %p109 = por %p107, %p108
    %p110 = scmp.ne.s32.totalorder %s96, %s97
    %p111 = scmp.eq.s32.totalorder %s19, 7
    %p112 = por %p110, %p111
    %p114 = scmp.ne.s32.totalorder %s97, %s113
    %p115 = scmp.eq.s32.totalorder %s19, 0
    %p116 = por %p114, %p115
    %s117 = ssub.s32 %s20, %s32
    %s118 = ssub.s32 %s21, %s28
    %s119 = sor.u32 %s117, %s118
    %p120 = scmp.eq.s32.totalorder %s119, 0
    %s122 = sadd.s32 %s121, 1
    %s123 = scalar_select %p120, %s121, %s122
    %p126 = pneg %p120
    %p127 = scmp.eq.s32.totalorder %s13, 7
    %p128 = por %p126, %p127
    %p129 = scmp.ne.s32.totalorder %s121, %s124
    %p130 = scmp.eq.s32.totalorder %s13, 0
    %p131 = por %p129, %p130
    %p132 = scmp.ne.s32.totalorder %s121, %s124
    %p133 = scmp.eq.s32.totalorder %s18, 7
    %p134 = por %p132, %p133
    %p135 = scmp.ne.s32.totalorder %s124, %s125
    %p136 = scmp.eq.s32.totalorder %s18, 0
    %p137 = por %p135, %p136
    %p138 = scmp.ne.s32.totalorder %s124, %s125
    %p139 = scmp.eq.s32.totalorder %s19, 7
    %p140 = por %p138, %p139
    %p142 = scmp.ne.s32.totalorder %s125, %s141
    %p143 = scmp.eq.s32.totalorder %s19, 0
    %p144 = por %p142, %p143
    %s146 = sadd.s32 %s145, 1
    %p149 = scmp.eq.s32.totalorder %s13, 7
    %p150 = scmp.ne.s32.totalorder %s145, %s147
    %p151 = scmp.eq.s32.totalorder %s13, 0
    %p152 = por %p150, %p151
    %p153 = scmp.ne.s32.totalorder %s145, %s147
    %p154 = scmp.eq.s32.totalorder %s18, 7
    %p155 = por %p153, %p154
    %p156 = scmp.ne.s32.totalorder %s147, %s148
    %p157 = scmp.eq.s32.totalorder %s18, 0
    %p158 = por %p156, %p157
    %p159 = scmp.ne.s32.totalorder %s147, %s148
    %p160 = scmp.eq.s32.totalorder %s19, 7
    %p161 = por %p159, %p160
    %p163 = scmp.ne.s32.totalorder %s148, %s162
    %p164 = scmp.eq.s32.totalorder %s19, 0
    %p165 = por %p163, %p164
    %s167 = sadd.s32 %s166, 1
    %p170 = scmp.eq.s32.totalorder %s13, 7
    %p171 = scmp.ne.s32.totalorder %s166, %s168
    %p172 = scmp.eq.s32.totalorder %s13, 0
    %p173 = por %p171, %p172
    %p174 = scmp.ne.s32.totalorder %s166, %s168
    %p175 = scmp.eq.s32.totalorder %s18, 7
    %p176 = por %p174, %p175
    %p177 = scmp.ne.s32.totalorder %s168, %s169
    %p178 = scmp.eq.s32.totalorder %s18, 0
    %p179 = por %p177, %p178
    %p180 = scmp.ne.s32.totalorder %s168, %s169
    %p181 = scmp.eq.s32.totalorder %s19, 7
    %p182 = por %p180, %p181
    %p184 = scmp.ne.s32.totalorder %s169, %s183
    %p185 = scmp.eq.s32.totalorder %s19, 0
    %p186 = por %p184, %p185
    %s188 = sadd.s32 %s187, 1
    %p191 = scmp.eq.s32.totalorder %s13, 7
    %p192 = scmp.ne.s32.totalorder %s187, %s189
    %p193 = scmp.eq.s32.totalorder %s13, 0
    %p194 = por %p192, %p193
    %p195 = scmp.ne.s32.totalorder %s187, %s189
    %p196 = scmp.eq.s32.totalorder %s18, 7
    %p197 = por %p195, %p196
    %p198 = scmp.ne.s32.totalorder %s189, %s190
    %p199 = scmp.eq.s32.totalorder %s18, 0
    %p200 = por %p198, %p199
    %p201 = scmp.ne.s32.totalorder %s189, %s190
    %p202 = scmp.eq.s32.totalorder %s19, 7
    %p203 = por %p201, %p202
    %p205 = scmp.ne.s32.totalorder %s190, %s204
    %p206 = scmp.eq.s32.totalorder %s19, 0
    %p207 = por %p205, %p206
    %s208 = ssub.s32 %s20, %s32
    %s209 = ssub.s32 %s21, %s28
    %s210 = sor.u32 %s208, %s209
    %p211 = scmp.eq.s32.totalorder %s210, 0
    %s213 = sadd.s32 %s212, 1
    %s214 = scalar_select %p211, %s212, %s213
    %p217 = pneg %p211
    %p218 = scmp.eq.s32.totalorder %s13, 7
    %p219 = por %p217, %p218
    %p220 = scmp.ne.s32.totalorder %s212, %s215
    %p221 = scmp.eq.s32.totalorder %s13, 0
    %p222 = por %p220, %p221
    %p223 = scmp.ne.s32.totalorder %s212, %s215
    %p224 = scmp.eq.s32.totalorder %s18, 7
    %p225 = por %p223, %p224
    %p226 = scmp.ne.s32.totalorder %s215, %s216
    %p227 = scmp.eq.s32.totalorder %s18, 0
    %p228 = por %p226, %p227
    %p229 = scmp.ne.s32.totalorder %s215, %s216
    %p230 = scmp.eq.s32.totalorder %s19, 7
    %p231 = por %p229, %p230
    %p233 = scmp.ne.s32.totalorder %s216, %s232
    %p234 = scmp.eq.s32.totalorder %s19, 0
    %p235 = por %p233, %p234
    %p236 = scmp.le.s32.totalorder 1, %s13
    %p237 = scmp.lt.s32.totalorder %s13, 9
    %p238 = pnand %p236, %p237
    %p239 = pneg %p238
    // Predicated region
    $region9: #{spatial_modulated_conv2d.1} parent=5 // pred_check
      _
    $region10: #{spatial_modulated_conv2d.1} parent=5 // pred_check_branch
      %241 = sbr.rel (%p238) target = $region12
    $region11: #{spatial_modulated_conv2d.1} parent=5 // pred_region
      %s242 = ssub.s32 %s13, 1
      // Predicated region
      $region13: #{spatial_modulated_conv2d.1} parent=11 // pred_check
        %p243 = pneg %p158
      $region14: #{spatial_modulated_conv2d.1} parent=11 // pred_check_branch
        %245 = sbr.rel (%p243) target = $region16
      $region15: #{spatial_modulated_conv2d.1} parent=11 // pred_region
        _
      $region16: #{spatial_modulated_conv2d.1} parent=11 // pred_fallthru
        _
      // Predicated region
      $region17: #{spatial_modulated_conv2d.1} parent=11 // pred_check
        %p246 = pneg %p179
      $region18: #{spatial_modulated_conv2d.1} parent=11 // pred_check_branch
        %248 = sbr.rel (%p246) target = $region20
      $region19: #{spatial_modulated_conv2d.1} parent=11 // pred_region
        _
      $region20: #{spatial_modulated_conv2d.1} parent=11 // pred_fallthru
        _
      // Predicated region
      $region21: #{spatial_modulated_conv2d.1} parent=11 // pred_check
        %p249 = pneg %p200
      $region22: #{spatial_modulated_conv2d.1} parent=11 // pred_check_branch
        %251 = sbr.rel (%p249) target = $region24
      $region23: #{spatial_modulated_conv2d.1} parent=11 // pred_region
        _
      $region24: #{spatial_modulated_conv2d.1} parent=11 // pred_fallthru
        _
    $region12: #{spatial_modulated_conv2d.1} parent=5 // pred_fallthru
      _
    %p252 = scmp.lt.s32.totalorder %s13, 8
    // Predicated region
    $region25: #{spatial_modulated_conv2d.1} parent=5 // pred_check
      %p253 = pneg %p252
    $region26: #{spatial_modulated_conv2d.1} parent=5 // pred_check_branch
      %255 = sbr.rel (%p253) target = $region28
    $region27: #{spatial_modulated_conv2d.1} parent=5 // pred_region
      // Predicated region
      $region29: #{spatial_modulated_conv2d.1} parent=27 // pred_check
        %p256 = pneg %p47
      $region30: #{spatial_modulated_conv2d.1} parent=27 // pred_check_branch
        %258 = sbr.rel (%p256) target = $region32
      $region31: #{spatial_modulated_conv2d.1} parent=27 // pred_region
        %p259 = scmp.lt.s32.totalorder %s20, 1
        %s260 = scalar_select %p259, %s20, 1
        %p261 = scmp.lt.s32.totalorder %s21, 3
        %s262 = scalar_select %p261, %s21, 3
        %s263 = smul.addr %s262, 12
        %s264 = smul.addr %s260, 48
        %s265 = sadd.s32 %s263, %s264
        %s266 = smul.addr %s265, 4
        %s267 = scalar_lea.vmem %s0, %s266
      $region32: #{spatial_modulated_conv2d.1} parent=27 // pred_fallthru
        _
      // Predicated region
      $region33: #{spatial_modulated_conv2d.1} parent=27 // pred_check
        %p268 = pneg %p75
      $region34: #{spatial_modulated_conv2d.1} parent=27 // pred_check_branch
        %270 = sbr.rel (%p268) target = $region36
      $region35: #{spatial_modulated_conv2d.1} parent=27 // pred_region
        %p271 = scmp.lt.s32.totalorder %s20, 1
        %s272 = scalar_select %p271, %s20, 1
        %p273 = scmp.lt.s32.totalorder %s21, 3
        %s274 = scalar_select %p273, %s21, 3
        %s275 = smul.addr %s274, 6
        %s276 = smul.addr %s272, 24
        %s277 = sadd.s32 %s275, %s276
        %s278 = smul.addr %s277, 4
        %s279 = scalar_lea.vmem %s1, %s278
      $region36: #{spatial_modulated_conv2d.1} parent=27 // pred_fallthru
        _
      // Predicated region
      $region37: #{spatial_modulated_conv2d.1} parent=27 // pred_check
        %p280 = pneg %p103
      $region38: #{spatial_modulated_conv2d.1} parent=27 // pred_check_branch
        %282 = sbr.rel (%p280) target = $region40
      $region39: #{spatial_modulated_conv2d.1} parent=27 // pred_region
        %p283 = scmp.lt.s32.totalorder %s20, 1
        %s284 = scalar_select %p283, %s20, 1
        %p285 = scmp.lt.s32.totalorder %s21, 3
        %s286 = scalar_select %p285, %s21, 3
        %s287 = smul.addr %s286, 12
        %s288 = smul.addr %s284, 48
        %s289 = sadd.s32 %s287, %s288
        %s290 = smul.addr %s289, 4
        %s291 = scalar_lea.vmem %s2, %s290
      $region40: #{spatial_modulated_conv2d.1} parent=27 // pred_fallthru
        _
      // Predicated region
      $region41: #{spatial_modulated_conv2d.1} parent=27 // pred_check
        %p292 = pneg %p131
      $region42: #{spatial_modulated_conv2d.1} parent=27 // pred_check_branch
        %294 = sbr.rel (%p292) target = $region44
      $region43: #{spatial_modulated_conv2d.1} parent=27 // pred_region
        %p295 = scmp.lt.s32.totalorder %s20, 1
        %s296 = scalar_select %p295, %s20, 1
        %p297 = scmp.lt.s32.totalorder %s21, 3
        %s298 = scalar_select %p297, %s21, 3
        %s299 = smul.addr %s298, 6
        %s300 = smul.addr %s296, 24
        %s301 = sadd.s32 %s299, %s300
        %s302 = smul.addr %s301, 4
        %s303 = scalar_lea.vmem %s3, %s302
      $region44: #{spatial_modulated_conv2d.1} parent=27 // pred_fallthru
        _
    $region28: #{spatial_modulated_conv2d.1} parent=5 // pred_fallthru
      _
    %p304 = scmp.le.s32.totalorder 1, %s13
    %p305 = scmp.lt.s32.totalorder %s13, 9
    %p306 = pnand %p304, %p305
    %p307 = pneg %p306
    // Predicated region
    $region45: #{spatial_modulated_conv2d.1} parent=5 // pred_check
      _
    $region46: #{spatial_modulated_conv2d.1} parent=5 // pred_check_branch
      %309 = sbr.rel (%p306) target = $region48
    $region47: #{spatial_modulated_conv2d.1} parent=5 // pred_region
      %s310 = ssub.s32 %s13, 1
      %p311 = scmp.lt.s32.totalorder %s22, 1
      %s312 = scalar_select %p311, %s22, 1
      %p313 = scmp.lt.s32.totalorder %s23, 3
      %s314 = scalar_select %p313, %s23, 3
      %s315 = smul.addr %s314, 12
      %s316 = smul.addr %s312, 48
      %s317 = sadd.s32 %s315, %s316
      %s318 = smul.addr %s317, 4
      %s319 = scalar_lea.vmem %s0, %s318
      %p320 = pneg %p53
      %p321 = pneg %p50
      %p322 = scmp.lt.s32.totalorder %s22, 1
      %s323 = scalar_select %p322, %s22, 1
      %p324 = scmp.lt.s32.totalorder %s23, 3
      %s325 = scalar_select %p324, %s23, 3
      %s326 = smul.addr %s325, 6
      %s327 = smul.addr %s323, 24
      %s328 = sadd.s32 %s326, %s327
      %s329 = smul.addr %s328, 4
      %s330 = scalar_lea.vmem %s1, %s329
      %p331 = pneg %p81
      %p332 = pneg %p78
      %p333 = scmp.lt.s32.totalorder %s22, 1
      %s334 = scalar_select %p333, %s22, 1
      %p335 = scmp.lt.s32.totalorder %s23, 3
      %s336 = scalar_select %p335, %s23, 3
      %s337 = smul.addr %s336, 12
      %s338 = smul.addr %s334, 48
      %s339 = sadd.s32 %s337, %s338
      %s340 = smul.addr %s339, 4
      %s341 = scalar_lea.vmem %s2, %s340
      %p342 = pneg %p109
      %p343 = pneg %p106
      %p344 = scmp.lt.s32.totalorder %s22, 1
      %s345 = scalar_select %p344, %s22, 1
      %p346 = scmp.lt.s32.totalorder %s23, 3
      %s347 = scalar_select %p346, %s23, 3
      %s348 = smul.addr %s347, 6
      %s349 = smul.addr %s345, 24
      %s350 = sadd.s32 %s348, %s349
      %s351 = smul.addr %s350, 4
      %s352 = scalar_lea.vmem %s3, %s351
      %p353 = pneg %p137
      %p354 = pneg %p134
      %p355 = pneg %p158
      %p356 = pneg %p155
      %p357 = pneg %p179
      %p358 = pneg %p176
      %p359 = pneg %p200
      %p360 = pneg %p197
      %p361 = pneg %p228
      %p362 = pneg %p225
      %p363 = scmp.lt.s32.totalorder %s22, 1
      %s364 = scalar_select %p363, %s22, 1
      %p365 = scmp.lt.s32.totalorder %s23, 3
      %s366 = scalar_select %p365, %s23, 3
      %s367 = smul.addr %s366, 8
      %s368 = smul.addr %s364, 32
      %s369 = sadd.s32 %s367, %s368
      %s370 = smul.addr %s369, 8
      %s371 = scalar_lea.vmem %s7, %s370
      %p372 = scmp.lt.s32.totalorder %s22, 1
      %s373 = scalar_select %p372, %s22, 1
      %p374 = scmp.lt.s32.totalorder %s23, 3
      %s375 = scalar_select %p374, %s23, 3
      %s376 = smul.addr %s375, 12
      %s377 = smul.addr %s373, 48
      %s378 = sadd.s32 %s376, %s377
      %s379 = smul.addr %s378, 4
      %s380 = scalar_lea.vmem %s0, %s379
      %p381 = scmp.lt.s32.totalorder %s22, 1
      %s382 = scalar_select %p381, %s22, 1
      %p383 = scmp.lt.s32.totalorder %s23, 3
      %s384 = scalar_select %p383, %s23, 3
      %s385 = smul.addr %s384, 6
      %s386 = smul.addr %s382, 24
      %s387 = sadd.s32 %s385, %s386
      %s388 = smul.addr %s387, 4
      %s389 = scalar_lea.vmem %s1, %s388
      %p390 = scmp.lt.s32.totalorder %s22, 1
      %s391 = scalar_select %p390, %s22, 1
      %p392 = scmp.lt.s32.totalorder %s23, 3
      %s393 = scalar_select %p392, %s23, 3
      %s394 = smul.addr %s393, 12
      %s395 = smul.addr %s391, 48
      %s396 = sadd.s32 %s394, %s395
      %s397 = smul.addr %s396, 4
      %s398 = scalar_lea.vmem %s2, %s397
      %p399 = scmp.lt.s32.totalorder %s22, 1
      %s400 = scalar_select %p399, %s22, 1
      %p401 = scmp.lt.s32.totalorder %s23, 3
      %s402 = scalar_select %p401, %s23, 3
      %s403 = smul.addr %s402, 6
      %s404 = smul.addr %s400, 24
      %s405 = sadd.s32 %s403, %s404
      %s406 = smul.addr %s405, 4
      %s407 = scalar_lea.vmem %s3, %s406
      %p408 = scmp.lt.s32.totalorder %s22, 1
      %s409 = scalar_select %p408, %s22, 1
      %p410 = scmp.lt.s32.totalorder %s23, 3
      %s411 = scalar_select %p410, %s23, 3
      %s412 = smul.addr %s411, 8
      %s413 = smul.addr %s409, 32
      %s414 = sadd.s32 %s412, %s413
      %s415 = smul.addr %s414, 8
      %s416 = scalar_lea.vmem %s7, %s415
      %v418 = vld [vmem:[%s380] sm:$0xf]
      %v419 = vld [vmem:[%s380 + $0x4] sm:$0xf]
      %v420 = vld [vmem:[%s380 + $0x8] sm:$0xf]
      %v421 = vld [vmem:[%s380 + $0xc] sm:$0xf]
      %v422 = vld [vmem:[%s380 + $0x10] sm:$0xf]
      %v423 = vld [vmem:[%s380 + $0x14] sm:$0xf]
      %v424 = vld [vmem:[%s380 + $0x18] sm:$0xf]
      %v425 = vld [vmem:[%s380 + $0x1c] sm:$0xf]
      %v426 = vld [vmem:[%s380 + $0x20] sm:$0xf]
      %v427 = vld [vmem:[%s380 + $0x24] sm:$0xf]
      %v428 = vld [vmem:[%s380 + $0x28] sm:$0xf]
      %v429 = vld [vmem:[%s380 + $0x2c] sm:$0xf]
      %v430 = vld [vmem:[%s398] sm:$0xf]
      %v431 = vld [vmem:[%s398 + $0x4] sm:$0xf]
      %v432 = vld [vmem:[%s398 + $0x8] sm:$0xf]
      %v433 = vld [vmem:[%s398 + $0xc] sm:$0xf]
      %v434 = vld [vmem:[%s398 + $0x10] sm:$0xf]
      %v435 = vld [vmem:[%s398 + $0x14] sm:$0xf]
      %v436 = vld [vmem:[%s398 + $0x18] sm:$0xf]
      %v437 = vld [vmem:[%s398 + $0x1c] sm:$0xf]
      %v438 = vld [vmem:[%s398 + $0x20] sm:$0xf]
      %v439 = vld [vmem:[%s398 + $0x24] sm:$0xf]
      %v440 = vld [vmem:[%s398 + $0x28] sm:$0xf]
      %v441 = vld [vmem:[%s398 + $0x2c] sm:$0xf]
      %v442 = vld [vmem:[%s4] sm:$0xf]
      %v443 = vld [vmem:[%s4 + $0x4] sm:$0xf]
      %v444 = vld [vmem:[%s4 + $0x8] sm:$0xf]
      %v445 = vld [vmem:[%s4 + $0xc] sm:$0xf]
      %v446 = vld [vmem:[%s4 + $0x10] sm:$0xf]
      %v447 = vld [vmem:[%s4 + $0x14] sm:$0xf]
      %v448 = vld [vmem:[%s4 + $0x18] sm:$0xf]
      %v449 = vld [vmem:[%s4 + $0x1c] sm:$0xf]
      %v450 = vld [vmem:[%s4 + $0x20] sm:$0xf]
      %v451 = vld [vmem:[%s4 + $0x24] sm:$0xf]
      %v452 = vld [vmem:[%s4 + $0x28] sm:$0xf]
      %v453 = vld [vmem:[%s4 + $0x2c] sm:$0xf]
      %v454 = vld [vmem:[%s4 + $0x30] sm:$0xf]
      %v455 = vld [vmem:[%s4 + $0x34] sm:$0xf]
      %v456 = vld [vmem:[%s4 + $0x38] sm:$0xf]
      %v457 = vld [vmem:[%s4 + $0x3c] sm:$0xf]
      %v458 = vld [vmem:[%s5] sm:$0x1]
      %v460 = vlaneseq
      %v461 = vshrl.u32 %v460, 7
      %v462 = vsub.s32 0, %v461
      %v463 = vrot.slane %v458, %v462
      %v477 = vunpack.c.l.b16 %v418
      %v478 = vunpack.c.l.b16 %v419
      %v479 = vunpack.c.l.b16 %v420
      %v480 = vunpack.c.l.b16 %v421
      %v481 = vunpack.c.l.b16 %v422
      %v482 = vunpack.c.l.b16 %v423
      %v483 = vunpack.c.l.b16 %v424
      %v484 = vunpack.c.l.b16 %v425
      %v485 = vunpack.c.l.b16 %v426
      %v486 = vunpack.c.l.b16 %v427
      %v487 = vunpack.c.l.b16 %v428
      %v488 = vunpack.c.l.b16 %v429
      %v489 = vpack.c.b16 %v478, %v477
      %v490 = vpack.c.b16 %v480, %v479
      %v491 = vpack.c.b16 %v482, %v481
      %v492 = vpack.c.b16 %v484, %v483
      %v493 = vpack.c.b16 %v486, %v485
      %v494 = vpack.c.b16 %v488, %v487
      %v517 = vunpack.c.l.b16 %v442
      %v518 = vunpack.c.l.b16 %v443
      %v519 = vunpack.c.l.b16 %v444
      %v520 = vunpack.c.l.b16 %v445
      %v521 = vunpack.c.l.b16 %v446
      %v522 = vunpack.c.l.b16 %v447
      %v523 = vunpack.c.l.b16 %v448
      %v524 = vunpack.c.l.b16 %v449
      %v525 = vunpack.c.l.b16 %v450
      %v526 = vunpack.c.l.b16 %v451
      %v527 = vunpack.c.l.b16 %v452
      %v528 = vunpack.c.l.b16 %v453
      %v529 = vunpack.c.l.b16 %v454
      %v530 = vunpack.c.l.b16 %v455
      %v531 = vunpack.c.l.b16 %v456
      %v532 = vunpack.c.l.b16 %v457
      %v533 = vpack.c.b16 %v518, %v517
      %v534 = vpack.c.b16 %v520, %v519
      %v535 = vpack.c.b16 %v522, %v521
      %v536 = vpack.c.b16 %v524, %v523
      %v537 = vpack.c.b16 %v526, %v525
      %v538 = vpack.c.b16 %v528, %v527
      %v539 = vpack.c.b16 %v530, %v529
      %v540 = vpack.c.b16 %v532, %v531
      %549 = vmatprep.subr.bf16.mxu0 0
      %550 = vmatpush1.bf16.msra.mxu0 %v533
      %551 = vmatprep.subr.bf16.mxu0 0
      %552 = vmatpush1.bf16.msra.mxu0 %v534
      %553 = vmatprep.subr.bf16.mxu0 0
      %554 = vmatpush1.bf16.msra.mxu0 %v535
      %555 = vmatprep.subr.bf16.mxu0 0
      %556 = vmatpush1.bf16.msra.mxu0 %v536
      %557 = vmatprep.subr.bf16.mxu0 0
      %558 = vmatpush1.bf16.msra.mxu0 %v537
      %559 = vmatprep.subr.bf16.mxu0 0
      %560 = vmatpush1.bf16.msra.mxu0 %v538
      %561 = vmatprep.subr.bf16.mxu0 0
      %562 = vmatpush1.bf16.msra.mxu0 %v539
      %563 = vmatprep.subr.bf16.mxu0 0
      %564 = vmatpush1.bf16.msra.mxu0 %v540
      %565 = vmatprep.subr.bf16.mxu0 0
      %566 = vmatpush1.bf16.msra.mxu0 0
      %567 = vmatprep.subr.bf16.mxu0 0
      %568 = vmatpush1.bf16.msra.mxu0 0
      %569 = vmatprep.subr.bf16.mxu0 0
      %570 = vmatpush1.bf16.msra.mxu0 0
      %571 = vmatprep.subr.bf16.mxu0 0
      %572 = vmatpush1.bf16.msra.mxu0 0
      %573 = vmatprep.subr.bf16.mxu0 0
      %574 = vmatpush1.bf16.msra.mxu0 0
      %575 = vmatprep.subr.bf16.mxu0 0
      %576 = vmatpush1.bf16.msra.mxu0 0
      %577 = vmatprep.subr.bf16.mxu0 0
      %578 = vmatpush1.bf16.msra.mxu0 0
      %579 = vmatprep.subr.bf16.mxu0 0
      %580 = vmatpush1.bf16.msra.mxu0 0
      %581 = vmatprep.mubr.bf16.mxu0 0
      %582 = vmatmul.mubr.bf16.gmra.mrb[0].mxu0 %v489
      %v583 = vpop.f32.mrb[0].mxu0
      %v584 = vadd.f32 %v463, %v583
      %v585 = vpop.f32.mrb[0].mxu0
      %v586 = vpop.f32.mrb[0].mxu0
      %v587 = vadd.f32 %v463, %v586
      %v588 = vpop.f32.mrb[0].mxu0
      %589 = vmatprep.mubr.bf16.mxu0 0
      %590 = vmatmul.mubr.bf16.gmra.mrb[0].mxu0 %v490
      %v591 = vpop.f32.mrb[0].mxu0
      %v592 = vadd.f32 %v463, %v591
      %v593 = vpop.f32.mrb[0].mxu0
      %v594 = vpop.f32.mrb[0].mxu0
      %v595 = vadd.f32 %v463, %v594
      %v596 = vpop.f32.mrb[0].mxu0
      %597 = vmatprep.mubr.bf16.mxu0 0
      %598 = vmatmul.mubr.bf16.gmra.mrb[0].mxu0 %v491
      %v599 = vpop.f32.mrb[0].mxu0
      %v600 = vadd.f32 %v463, %v599
      %v601 = vpop.f32.mrb[0].mxu0
      %v602 = vpop.f32.mrb[0].mxu0
      %v603 = vadd.f32 %v463, %v602
      %v604 = vpop.f32.mrb[0].mxu0
      %605 = vmatprep.mubr.bf16.mxu0 0
      %606 = vmatmul.mubr.bf16.gmra.mrb[0].mxu0 %v492
      %v607 = vpop.f32.mrb[0].mxu0
      %v608 = vadd.f32 %v463, %v607
      %v609 = vpop.f32.mrb[0].mxu0
      %v610 = vpop.f32.mrb[0].mxu0
      %v611 = vadd.f32 %v463, %v610
      %v612 = vpop.f32.mrb[0].mxu0
      %613 = vmatprep.mubr.bf16.mxu0 0
      %614 = vmatmul.mubr.bf16.gmra.mrb[0].mxu0 %v493
      %v615 = vpop.f32.mrb[0].mxu0
      %v616 = vadd.f32 %v463, %v615
      %v617 = vpop.f32.mrb[0].mxu0
      %v618 = vpop.f32.mrb[0].mxu0
      %v619 = vadd.f32 %v463, %v618
      %v620 = vpop.f32.mrb[0].mxu0
      %621 = vmatprep.mubr.bf16.mxu0 0
      %622 = vmatmul.mubr.bf16.gmra.mrb[0].mxu0 %v494
      %v623 = vpop.f32.mrb[0].mxu0
      %v624 = vadd.f32 %v463, %v623
      %v625 = vpop.f32.mrb[0].mxu0
      %v626 = vpop.f32.mrb[0].mxu0
      %v627 = vadd.f32 %v463, %v626
      %v628 = vpop.f32.mrb[0].mxu0
      %629 = vdwg.mxu0
      %v630 = vmul.f32 %v584, %v584
      %v631 = vmul.f32 %v587, %v587
      %v632 = vmul.f32 %v592, %v592
      %v633 = vmul.f32 %v595, %v595
      %v634 = vmul.f32 %v600, %v600
      %v635 = vmul.f32 %v603, %v603
      %v636 = vmul.f32 %v608, %v608
      %v637 = vmul.f32 %v611, %v611
      %v638 = vmul.f32 %v616, %v616
      %v639 = vmul.f32 %v619, %v619
      %v640 = vmul.f32 %v624, %v624
      %v641 = vmul.f32 %v627, %v627
      %642 = vadd.xlane.f32.xlu0 %v630
      %v643 = vpop.xlane.xlu0 %642
      %644 = vadd.xlane.f32.xlu0 %v631
      %v645 = vpop.xlane.xlu0 %644
      %646 = vadd.xlane.f32.xlu0 %v632
      %v647 = vpop.xlane.xlu0 %646
      %648 = vadd.xlane.f32.xlu0 %v633
      %v649 = vpop.xlane.xlu0 %648
      %650 = vadd.xlane.f32.xlu0 %v634
      %v651 = vpop.xlane.xlu0 %650
      %652 = vadd.xlane.f32.xlu0 %v635
      %v653 = vpop.xlane.xlu0 %652
      %654 = vadd.xlane.f32.xlu0 %v636
      %v655 = vpop.xlane.xlu0 %654
      %656 = vadd.xlane.f32.xlu0 %v637
      %v657 = vpop.xlane.xlu0 %656
      %658 = vadd.xlane.f32.xlu0 %v638
      %v659 = vpop.xlane.xlu0 %658
      %660 = vadd.xlane.f32.xlu0 %v639
      %v661 = vpop.xlane.xlu0 %660
      %662 = vadd.xlane.f32.xlu0 %v640
      %v663 = vpop.xlane.xlu0 %662
      %664 = vadd.xlane.f32.xlu0 %v641
      %v665 = vpop.xlane.xlu0 %664
      %v666 = vmul.f32 %v643, 0.125
      %v667 = vmul.f32 %v645, 0.125
      %v668 = vmul.f32 %v647, 0.125
      %v669 = vmul.f32 %v649, 0.125
      %v670 = vmul.f32 %v651, 0.125
      %v671 = vmul.f32 %v653, 0.125
      %v672 = vmul.f32 %v655, 0.125
      %v673 = vmul.f32 %v657, 0.125
      %v674 = vmul.f32 %v659, 0.125
      %v675 = vmul.f32 %v661, 0.125
      %v676 = vmul.f32 %v663, 0.125
      %v677 = vmul.f32 %v665, 0.125
      %v678 = vadd.f32 %v666, 1e-08
      %v679 = vadd.f32 %v667, 1e-08
      %v680 = vadd.f32 %v668, 1e-08
      %v681 = vadd.f32 %v669, 1e-08
      %v682 = vadd.f32 %v670, 1e-08
      %v683 = vadd.f32 %v671, 1e-08
      %v684 = vadd.f32 %v672, 1e-08
      %v685 = vadd.f32 %v673, 1e-08
      %v686 = vadd.f32 %v674, 1e-08
      %v687 = vadd.f32 %v675, 1e-08
      %v688 = vadd.f32 %v676, 1e-08
      %v689 = vadd.f32 %v677, 1e-08
      %v690 = vrsqrt.pop %v678
      %v691 = vrsqrt.pop %v679
      %v692 = vrsqrt.pop %v680
      %v693 = vrsqrt.pop %v681
      %v694 = vrsqrt.pop %v682
      %v695 = vrsqrt.pop %v683
      %v696 = vrsqrt.pop %v684
      %v697 = vrsqrt.pop %v685
      %v698 = vrsqrt.pop %v686
      %v699 = vrsqrt.pop %v687
      %v700 = vrsqrt.pop %v688
      %v701 = vrsqrt.pop %v689
      %v702 = vmul.f32 %v584, %v690
      %v703 = vmul.f32 %v587, %v691
      %v704 = vmul.f32 %v592, %v692
      %v705 = vmul.f32 %v595, %v693
      %v706 = vmul.f32 %v600, %v694
      %v707 = vmul.f32 %v603, %v695
      %v708 = vmul.f32 %v608, %v696
      %v709 = vmul.f32 %v611, %v697
      %v710 = vmul.f32 %v616, %v698
      %v711 = vmul.f32 %v619, %v699
      %v712 = vmul.f32 %v624, %v700
      %v713 = vmul.f32 %v627, %v701
      %v714 = vunpack.c.l.bf16 %v430
      %v715 = vunpack.c.l.bf16 %v431
      %v716 = vunpack.c.l.bf16 %v432
      %v717 = vunpack.c.l.bf16 %v433
      %v718 = vunpack.c.l.bf16 %v434
      %v719 = vunpack.c.l.bf16 %v435
      %v720 = vunpack.c.l.bf16 %v436
      %v721 = vunpack.c.l.bf16 %v437
      %v722 = vunpack.c.l.bf16 %v438
      %v723 = vunpack.c.l.bf16 %v439
      %v724 = vunpack.c.l.bf16 %v440
      %v725 = vunpack.c.l.bf16 %v441
      %v726 = vmul.f32 %v714, %v702
      %v727 = vmul.f32 %v715, %v703
      %v728 = vmul.f32 %v716, %v704
      %v729 = vmul.f32 %v717, %v705
      %v730 = vmul.f32 %v718, %v706
      %v731 = vmul.f32 %v719, %v707
      %v732 = vmul.f32 %v720, %v708
      %v733 = vmul.f32 %v721, %v709
      %v734 = vmul.f32 %v722, %v710
      %v735 = vmul.f32 %v723, %v711
      %v736 = vmul.f32 %v724, %v712
      %v737 = vmul.f32 %v725, %v713
      %v738 = vpack.c.bf16 %v727, %v726
      %v739 = vpack.c.bf16 %v729, %v728
      %v740 = vpack.c.bf16 %v731, %v730
      %v741 = vpack.c.bf16 %v733, %v732
      %v742 = vpack.c.bf16 %v735, %v734
      %v743 = vpack.c.bf16 %v737, %v736
      %v744 = vld [vmem:[%s389] sm:$0xf]
      %v745 = vld [vmem:[%s389 + $0x4] sm:$0xf]
      %v746 = vld [vmem:[%s389 + $0x8] sm:$0xf]
      %v747 = vld [vmem:[%s389 + $0xc] sm:$0xf]
      %v748 = vld [vmem:[%s389 + $0x10] sm:$0xf]
      %v749 = vld [vmem:[%s389 + $0x14] sm:$0xf]
      %v750 = vld [vmem:[%s407] sm:$0xf]
      %v751 = vld [vmem:[%s407 + $0x4] sm:$0xf]
      %v752 = vld [vmem:[%s407 + $0x8] sm:$0xf]
      %v753 = vld [vmem:[%s407 + $0xc] sm:$0xf]
      %v754 = vld [vmem:[%s407 + $0x10] sm:$0xf]
      %v755 = vld [vmem:[%s407 + $0x14] sm:$0xf]
      %v762 = vunpack.c.l.b16 %v744
      %v763 = vunpack.c.l.b16 %v745
      %v764 = vunpack.c.l.b16 %v746
      %v765 = vunpack.c.l.b16 %v747
      %v766 = vunpack.c.l.b16 %v748
      %v767 = vunpack.c.l.b16 %v749
      %v768 = vpack.c.b16 %v763, %v762
      %v769 = vpack.c.b16 %v765, %v764
      %v770 = vpack.c.b16 %v767, %v766
      %774 = vmatprep.subr.bf16.mxu0 0
      %775 = vmatpush1.bf16.msra.mxu0 %v533
      %776 = vmatprep.subr.bf16.mxu0 0
      %777 = vmatpush1.bf16.msra.mxu0 %v534
      %778 = vmatprep.subr.bf16.mxu0 0
      %779 = vmatpush1.bf16.msra.mxu0 %v535
      %780 = vmatprep.subr.bf16.mxu0 0
      %781 = vmatpush1.bf16.msra.mxu0 %v536
      %782 = vmatprep.subr.bf16.mxu0 0
      %783 = vmatpush1.bf16.msra.mxu0 %v537
      %784 = vmatprep.subr.bf16.mxu0 0
      %785 = vmatpush1.bf16.msra.mxu0 %v538
      %786 = vmatprep.subr.bf16.mxu0 0
      %787 = vmatpush1.bf16.msra.mxu0 %v539
      %788 = vmatprep.subr.bf16.mxu0 0
      %789 = vmatpush1.bf16.msra.mxu0 %v540
      %790 = vmatprep.subr.bf16.mxu0 0
      %791 = vmatpush1.bf16.msra.mxu0 0
      %792 = vmatprep.subr.bf16.mxu0 0
      %793 = vmatpush1.bf16.msra.mxu0 0
      %794 = vmatprep.subr.bf16.mxu0 0
      %795 = vmatpush1.bf16.msra.mxu0 0
      %796 = vmatprep.subr.bf16.mxu0 0
      %797 = vmatpush1.bf16.msra.mxu0 0
      %798 = vmatprep.subr.bf16.mxu0 0
      %799 = vmatpush1.bf16.msra.mxu0 0
      %800 = vmatprep.subr.bf16.mxu0 0
      %801 = vmatpush1.bf16.msra.mxu0 0
      %802 = vmatprep.subr.bf16.mxu0 0
      %803 = vmatpush1.bf16.msra.mxu0 0
      %804 = vmatprep.subr.bf16.mxu0 0
      %805 = vmatpush1.bf16.msra.mxu0 0
      %806 = vmatprep.mubr.bf16.mxu0 0
      %807 = vmatmul.mubr.bf16.gmra.mrb[0].mxu0 %v768
      %v808 = vpop.f32.mrb[0].mxu0
      %v809 = vadd.f32 %v463, %v808
      %v810 = vpop.f32.mrb[0].mxu0
      %v811 = vpop.f32.mrb[0].mxu0
      %v812 = vadd.f32 %v463, %v811
      %v813 = vpop.f32.mrb[0].mxu0
      %814 = vmatprep.mubr.bf16.mxu0 0
      %815 = vmatmul.mubr.bf16.gmra.mrb[0].mxu0 %v769
      %v816 = vpop.f32.mrb[0].mxu0
      %v817 = vadd.f32 %v463, %v816
      %v818 = vpop.f32.mrb[0].mxu0
      %v819 = vpop.f32.mrb[0].mxu0
      %v820 = vadd.f32 %v463, %v819
      %v821 = vpop.f32.mrb[0].mxu0
      %822 = vmatprep.mubr.bf16.mxu0 0
      %823 = vmatmul.mubr.bf16.gmra.mrb[0].mxu0 %v770
      %v824 = vpop.f32.mrb[0].mxu0
      %v825 = vadd.f32 %v463, %v824
      %v826 = vpop.f32.mrb[0].mxu0
      %v827 = vpop.f32.mrb[0].mxu0
      %v828 = vadd.f32 %v463, %v827
      %v829 = vpop.f32.mrb[0].mxu0
      %830 = vdwg.mxu0
      %v831 = vmul.f32 %v809, %v809
      %v832 = vmul.f32 %v812, %v812
      %v833 = vmul.f32 %v817, %v817
      %v834 = vmul.f32 %v820, %v820
      %v835 = vmul.f32 %v825, %v825
      %v836 = vmul.f32 %v828, %v828
      %837 = vadd.xlane.f32.xlu0 %v831
      %v838 = vpop.xlane.xlu0 %837
      %839 = vadd.xlane.f32.xlu0 %v832
      %v840 = vpop.xlane.xlu0 %839
      %841 = vadd.xlane.f32.xlu0 %v833
      %v842 = vpop.xlane.xlu0 %841
      %843 = vadd.xlane.f32.xlu0 %v834
      %v844 = vpop.xlane.xlu0 %843
      %845 = vadd.xlane.f32.xlu0 %v835
      %v846 = vpop.xlane.xlu0 %845
      %847 = vadd.xlane.f32.xlu0 %v836
      %v848 = vpop.xlane.xlu0 %847
      %v849 = vmul.f32 %v838, 0.125
      %v850 = vmul.f32 %v840, 0.125
      %v851 = vmul.f32 %v842, 0.125
      %v852 = vmul.f32 %v844, 0.125
      %v853 = vmul.f32 %v846, 0.125
      %v854 = vmul.f32 %v848, 0.125
      %v855 = vadd.f32 %v849, 1e-08
      %v856 = vadd.f32 %v850, 1e-08
      %v857 = vadd.f32 %v851, 1e-08
      %v858 = vadd.f32 %v852, 1e-08
      %v859 = vadd.f32 %v853, 1e-08
      %v860 = vadd.f32 %v854, 1e-08
      %v861 = vrsqrt.pop %v855
      %v862 = vrsqrt.pop %v856
      %v863 = vrsqrt.pop %v857
      %v864 = vrsqrt.pop %v858
      %v865 = vrsqrt.pop %v859
      %v866 = vrsqrt.pop %v860
      %v867 = vmul.f32 %v809, %v861
      %v868 = vmul.f32 %v812, %v862
      %v869 = vmul.f32 %v817, %v863
      %v870 = vmul.f32 %v820, %v864
      %v871 = vmul.f32 %v825, %v865
      %v872 = vmul.f32 %v828, %v866
      %v873 = vunpack.c.l.bf16 %v750
      %v874 = vunpack.c.l.bf16 %v751
      %v875 = vunpack.c.l.bf16 %v752
      %v876 = vunpack.c.l.bf16 %v753
      %v877 = vunpack.c.l.bf16 %v754
      %v878 = vunpack.c.l.bf16 %v755
      %v879 = vmul.f32 %v873, %v867
      %v880 = vmul.f32 %v874, %v868
      %v881 = vmul.f32 %v875, %v869
      %v882 = vmul.f32 %v876, %v870
      %v883 = vmul.f32 %v877, %v871
      %v884 = vmul.f32 %v878, %v872
      %v885 = vpack.c.bf16 %v880, %v879
      %v886 = vpack.c.bf16 %v882, %v881
      %v887 = vpack.c.bf16 %v884, %v883
      %vm894 = vcmask 1043456
      %v895 = vrot.slane %v738, 4
      %v896 = vrot.slane %v739, 4
      %v897 = vsel %vm894, %v895, %v896
      %v898 = vrot.slane %v740, 4
      %v899 = vsel %vm894, %v896, %v898
      %v900 = vrot.slane %v741, 4
      %v901 = vsel %vm894, %v898, %v900
      %v902 = vrot.slane %v742, 4
      %v903 = vsel %vm894, %v900, %v902
      %v904 = vrot.slane %v743, 4
      %v905 = vsel %vm894, %v902, %v904
      %vm911 = vcmask 1043456
      %v914 = vsel %vm911, %v886, %v895
      %v917 = vsel %vm911, %v904, %v886
      %v919 = vld [vmem:[%s6] sm:$0xf]
      %v920 = vld [vmem:[%s6 + $0x4] sm:$0xf]
      %v921 = vld [vmem:[%s6 + $0x8] sm:$0xf]
      %v922 = vld [vmem:[%s6 + $0xc] sm:$0xf]
      %v923 = vld [vmem:[%s6 + $0x10] sm:$0xf]
      %v924 = vld [vmem:[%s6 + $0x14] sm:$0xf]
      %v925 = vld [vmem:[%s6 + $0x18] sm:$0xf]
      %v926 = vld [vmem:[%s6 + $0x1c] sm:$0xf]
      %v927 = vld [vmem:[%s6 + $0x20] sm:$0xf]
      %v928 = vld [vmem:[%s6 + $0x24] sm:$0xf]
      %v929 = vld [vmem:[%s6 + $0x28] sm:$0xf]
      %v930 = vld [vmem:[%s6 + $0x2c] sm:$0xf]
      %v931 = vld [vmem:[%s6 + $0x30] sm:$0xf]
      %v932 = vld [vmem:[%s6 + $0x34] sm:$0xf]
      %v933 = vld [vmem:[%s6 + $0x38] sm:$0xf]
      %v934 = vld [vmem:[%s6 + $0x3c] sm:$0xf]
      %s935 = scalar_lea.vmem %s6, 192
      %v936 = vld [vmem:[%s935] sm:$0xf]
      %v937 = vld [vmem:[%s935 + $0x4] sm:$0xf]
      %v938 = vld [vmem:[%s935 + $0x8] sm:$0xf]
      %v939 = vld [vmem:[%s935 + $0xc] sm:$0xf]
      %v940 = vld [vmem:[%s935 + $0x10] sm:$0xf]
      %v941 = vld [vmem:[%s935 + $0x14] sm:$0xf]
      %v942 = vld [vmem:[%s935 + $0x18] sm:$0xf]
      %v943 = vld [vmem:[%s935 + $0x1c] sm:$0xf]
      %v944 = vld [vmem:[%s935 + $0x20] sm:$0xf]
      %v945 = vld [vmem:[%s935 + $0x24] sm:$0xf]
      %v946 = vld [vmem:[%s935 + $0x28] sm:$0xf]
      %v947 = vld [vmem:[%s935 + $0x2c] sm:$0xf]
      %v948 = vld [vmem:[%s935 + $0x30] sm:$0xf]
      %v949 = vld [vmem:[%s935 + $0x34] sm:$0xf]
      %v950 = vld [vmem:[%s935 + $0x38] sm:$0xf]
      %v951 = vld [vmem:[%s935 + $0x3c] sm:$0xf]
      %v954 = vrot.slane %v914, 4
      %v955 = vrot.slane %v897, 4
      %v956 = vsel %vm894, %v954, %v955
      %v957 = vrot.slane %v899, 4
      %v958 = vsel %vm894, %v955, %v957
      %v959 = vrot.slane %v901, 4
      %v960 = vsel %vm894, %v957, %v959
      %v961 = vrot.slane %v903, 4
      %v962 = vsel %vm894, %v959, %v961
      %v963 = vrot.slane %v905, 4
      %v964 = vsel %vm894, %v961, %v963
      %v965 = vrot.slane %v917, 4
      %v966 = vsel %vm894, %v963, %v965
      %v989 = vunpack.c.l.b16 %v936
      %v990 = vunpack.c.l.b16 %v937
      %v991 = vunpack.c.l.b16 %v938
      %v992 = vunpack.c.l.b16 %v939
      %v993 = vunpack.c.l.b16 %v940
      %v994 = vunpack.c.l.b16 %v941
      %v995 = vunpack.c.l.b16 %v942
      %v996 = vunpack.c.l.b16 %v943
      %v997 = vunpack.c.l.b16 %v944
      %v998 = vunpack.c.l.b16 %v945
      %v999 = vunpack.c.l.b16 %v946
      %v1000 = vunpack.c.l.b16 %v947
      %v1001 = vunpack.c.l.b16 %v948
      %v1002 = vunpack.c.l.b16 %v949
      %v1003 = vunpack.c.l.b16 %v950
      %v1004 = vunpack.c.l.b16 %v951
      %v1005 = vpack.c.b16 %v990, %v989
      %v1006 = vpack.c.b16 %v992, %v991
      %v1007 = vpack.c.b16 %v994, %v993
      %v1008 = vpack.c.b16 %v996, %v995
      %v1009 = vpack.c.b16 %v998, %v997
      %v1010 = vpack.c.b16 %v1000, %v999
      %v1011 = vpack.c.b16 %v1002, %v1001
      %v1012 = vpack.c.b16 %v1004, %v1003
      %1021 = vmatprep.subr.bf16.mxu0 0
      %1022 = vmatpush1.bf16.msra.mxu0 %v1005
      %1023 = vmatprep.subr.bf16.mxu0 0
      %1024 = vmatpush1.bf16.msra.mxu0 %v1006
      %1025 = vmatprep.subr.bf16.mxu0 0
      %1026 = vmatpush1.bf16.msra.mxu0 %v1007
      %1027 = vmatprep.subr.bf16.mxu0 0
      %1028 = vmatpush1.bf16.msra.mxu0 %v1008
      %1029 = vmatprep.subr.bf16.mxu0 0
      %1030 = vmatpush1.bf16.msra.mxu0 %v1009
      %1031 = vmatprep.subr.bf16.mxu0 0
      %1032 = vmatpush1.bf16.msra.mxu0 %v1010
      %1033 = vmatprep.subr.bf16.mxu0 0
      %1034 = vmatpush1.bf16.msra.mxu0 %v1011
      %1035 = vmatprep.subr.bf16.mxu0 0
      %1036 = vmatpush1.bf16.msra.mxu0 %v1012
      %1037 = vmatprep.subr.bf16.mxu0 0
      %1038 = vmatpush1.bf16.msra.mxu0 0
      %1039 = vmatprep.subr.bf16.mxu0 0
      %1040 = vmatpush1.bf16.msra.mxu0 0
      %1041 = vmatprep.subr.bf16.mxu0 0
      %1042 = vmatpush1.bf16.msra.mxu0 0
      %1043 = vmatprep.subr.bf16.mxu0 0
      %1044 = vmatpush1.bf16.msra.mxu0 0
      %1045 = vmatprep.subr.bf16.mxu0 0
      %1046 = vmatpush1.bf16.msra.mxu0 0
      %1047 = vmatprep.subr.bf16.mxu0 0
      %1048 = vmatpush1.bf16.msra.mxu0 0
      %1049 = vmatprep.subr.bf16.mxu0 0
      %1050 = vmatpush1.bf16.msra.mxu0 0
      %1051 = vmatprep.subr.bf16.mxu0 0
      %1052 = vmatpush1.bf16.msra.mxu0 0
      %1053 = vmatprep.mubr.bf16.mxu0 0
      %1054 = vmatmul.mubr.bf16.gmra.mrb[0].mxu0 %v956
      %v1055 = vpop.f32.mrb[0].mxu0
      %v1056 = vadd.f32 0.0, %v1055
      %v1057 = vpop.f32.mrb[0].mxu0
      %v1058 = vpop.f32.mrb[0].mxu0
      %v1059 = vadd.f32 0.0, %v1058
      %v1060 = vpop.f32.mrb[0].mxu0
      %1061 = vmatprep.mubr.bf16.mxu0 0
      %1062 = vmatmul.mubr.bf16.gmra.mrb[0].mxu0 %v958
      %v1063 = vpop.f32.mrb[0].mxu0
      %v1064 = vpop.f32.mrb[0].mxu0
      %v1065 = vpop.f32.mrb[0].mxu0
      %v1066 = vadd.f32 0.0, %v1065
      %v1067 = vpop.f32.mrb[0].mxu0
      %1068 = vmatprep.mubr.bf16.mxu0 0
      %1069 = vmatmul.mubr.bf16.gmra.mrb[0].mxu0 %v960
      %v1070 = vpop.f32.mrb[0].mxu0
      %v1071 = vadd.f32 0.0, %v1070
      %v1072 = vpop.f32.mrb[0].mxu0
      %v1073 = vpop.f32.mrb[0].mxu0
      %v1074 = vpop.f32.mrb[0].mxu0
      %1075 = vmatprep.mubr.bf16.mxu0 0
      %1076 = vmatmul.mubr.bf16.gmra.mrb[0].mxu0 %v962
      %v1077 = vpop.f32.mrb[0].mxu0
      %v1078 = vadd.f32 0.0, %v1077
      %v1079 = vpop.f32.mrb[0].mxu0
      %v1080 = vpop.f32.mrb[0].mxu0
      %v1081 = vadd.f32 0.0, %v1080
      %v1082 = vpop.f32.mrb[0].mxu0
      %1083 = vmatprep.mubr.bf16.mxu0 0
      %1084 = vmatmul.mubr.bf16.gmra.mrb[0].mxu0 %v964
      %v1085 = vpop.f32.mrb[0].mxu0
      %v1086 = vpop.f32.mrb[0].mxu0
      %v1087 = vpop.f32.mrb[0].mxu0
      %v1088 = vadd.f32 0.0, %v1087
      %v1089 = vpop.f32.mrb[0].mxu0
      %1090 = vmatprep.mubr.bf16.mxu0 0
      %1091 = vmatmul.mubr.bf16.gmra.mrb[0].mxu0 %v966
      %v1092 = vpop.f32.mrb[0].mxu0
      %v1093 = vadd.f32 0.0, %v1092
      %v1094 = vpop.f32.mrb[0].mxu0
      %v1095 = vpop.f32.mrb[0].mxu0
      %v1096 = vpop.f32.mrb[0].mxu0
      %1097 = vdwg.mxu0
      %v1114 = vunpack.c.l.b16 %v919
      %v1115 = vunpack.c.l.b16 %v920
      %v1116 = vunpack.c.l.b16 %v921
      %v1117 = vunpack.c.l.b16 %v922
      %v1118 = vunpack.c.l.b16 %v923
      %v1119 = vunpack.c.l.b16 %v924
      %v1120 = vunpack.c.l.b16 %v925
      %v1121 = vunpack.c.l.b16 %v926
      %v1122 = vunpack.c.l.b16 %v927
      %v1123 = vunpack.c.l.b16 %v928
      %v1124 = vunpack.c.l.b16 %v929
      %v1125 = vunpack.c.l.b16 %v930
      %v1126 = vunpack.c.l.b16 %v931
      %v1127 = vunpack.c.l.b16 %v932
      %v1128 = vunpack.c.l.b16 %v933
      %v1129 = vunpack.c.l.b16 %v934
      %v1130 = vpack.c.b16 %v1115, %v1114
      %v1131 = vpack.c.b16 %v1117, %v1116
      %v1132 = vpack.c.b16 %v1119, %v1118
      %v1133 = vpack.c.b16 %v1121, %v1120
      %v1134 = vpack.c.b16 %v1123, %v1122
      %v1135 = vpack.c.b16 %v1125, %v1124
      %v1136 = vpack.c.b16 %v1127, %v1126
      %v1137 = vpack.c.b16 %v1129, %v1128
      %1146 = vmatprep.subr.bf16.mxu0 0
      %1147 = vmatpush1.bf16.msra.mxu0 %v1130
      %1148 = vmatprep.subr.bf16.mxu0 0
      %1149 = vmatpush1.bf16.msra.mxu0 %v1131
      %1150 = vmatprep.subr.bf16.mxu0 0
      %1151 = vmatpush1.bf16.msra.mxu0 %v1132
      %1152 = vmatprep.subr.bf16.mxu0 0
      %1153 = vmatpush1.bf16.msra.mxu0 %v1133
      %1154 = vmatprep.subr.bf16.mxu0 0
      %1155 = vmatpush1.bf16.msra.mxu0 %v1134
      %1156 = vmatprep.subr.bf16.mxu0 0
      %1157 = vmatpush1.bf16.msra.mxu0 %v1135
      %1158 = vmatprep.subr.bf16.mxu0 0
      %1159 = vmatpush1.bf16.msra.mxu0 %v1136
      %1160 = vmatprep.subr.bf16.mxu0 0
      %1161 = vmatpush1.bf16.msra.mxu0 %v1137
      %1162 = vmatprep.subr.bf16.mxu0 0
      %1163 = vmatpush1.bf16.msra.mxu0 0
      %1164 = vmatprep.subr.bf16.mxu0 0
      %1165 = vmatpush1.bf16.msra.mxu0 0
      %1166 = vmatprep.subr.bf16.mxu0 0
      %1167 = vmatpush1.bf16.msra.mxu0 0
      %1168 = vmatprep.subr.bf16.mxu0 0
      %1169 = vmatpush1.bf16.msra.mxu0 0
      %1170 = vmatprep.subr.bf16.mxu0 0
      %1171 = vmatpush1.bf16.msra.mxu0 0
      %1172 = vmatprep.subr.bf16.mxu0 0
      %1173 = vmatpush1.bf16.msra.mxu0 0
      %1174 = vmatprep.subr.bf16.mxu0 0
      %1175 = vmatpush1.bf16.msra.mxu0 0
      %1176 = vmatprep.subr.bf16.mxu0 0
      %1177 = vmatpush1.bf16.msra.mxu0 0
      %1178 = vmatprep.mubr.bf16.mxu0 0
      %1179 = vmatmul.mubr.bf16.gmra.mrb[0].mxu0 %v885
      %v1180 = vpop.f32.mrb[0].mxu0
      %v1181 = vadd.f32 %v1056, %v1180
      %v1182 = vpop.f32.mrb[0].mxu0
      %v1183 = vpop.f32.mrb[0].mxu0
      %v1184 = vadd.f32 %v1059, %v1183
      %v1185 = vpop.f32.mrb[0].mxu0
      %1186 = vmatprep.mubr.bf16.mxu0 0
      %1187 = vmatmul.mubr.bf16.gmra.mrb[0].mxu0 %v914
      %v1188 = vpop.f32.mrb[0].mxu0
      %v1189 = vpop.f32.mrb[0].mxu0
      %v1190 = vpop.f32.mrb[0].mxu0
      %v1191 = vadd.f32 %v1066, %v1190
      %v1192 = vpop.f32.mrb[0].mxu0
      %1193 = vmatprep.mubr.bf16.mxu0 0
      %1194 = vmatmul.mubr.bf16.gmra.mrb[0].mxu0 %v897
      %v1195 = vpop.f32.mrb[0].mxu0
      %v1196 = vadd.f32 %v1071, %v1195
      %v1197 = vpop.f32.mrb[0].mxu0
      %v1198 = vpop.f32.mrb[0].mxu0
      %v1199 = vpop.f32.mrb[0].mxu0
      %1200 = vmatprep.mubr.bf16.mxu0 0
      %1201 = vmatmul.mubr.bf16.gmra.mrb[0].mxu0 %v899
      %v1202 = vpop.f32.mrb[0].mxu0
      %v1203 = vadd.f32 %v1078, %v1202
      %v1204 = vpop.f32.mrb[0].mxu0
      %v1205 = vpop.f32.mrb[0].mxu0
      %v1206 = vadd.f32 %v1081, %v1205
      %v1207 = vpop.f32.mrb[0].mxu0
      %1208 = vmatprep.mubr.bf16.mxu0 0
      %1209 = vmatmul.mubr.bf16.gmra.mrb[0].mxu0 %v901
      %v1210 = vpop.f32.mrb[0].mxu0
      %v1211 = vpop.f32.mrb[0].mxu0
      %v1212 = vpop.f32.mrb[0].mxu0
      %v1213 = vadd.f32 %v1088, %v1212
      %v1214 = vpop.f32.mrb[0].mxu0
      %1215 = vmatprep.mubr.bf16.mxu0 0
      %1216 = vmatmul.mubr.bf16.gmra.mrb[0].mxu0 %v903
      %v1217 = vpop.f32.mrb[0].mxu0
      %v1218 = vadd.f32 %v1093, %v1217
      %v1219 = vpop.f32.mrb[0].mxu0
      %v1220 = vpop.f32.mrb[0].mxu0
      %v1221 = vpop.f32.mrb[0].mxu0
      %1222 = vdwg.mxu0
      %s1223 = scalar_lea.vmem %s6, 384
      %v1224 = vld [vmem:[%s1223] sm:$0xf]
      %v1225 = vld [vmem:[%s1223 + $0x4] sm:$0xf]
      %v1226 = vld [vmem:[%s1223 + $0x8] sm:$0xf]
      %v1227 = vld [vmem:[%s1223 + $0xc] sm:$0xf]
      %v1228 = vld [vmem:[%s1223 + $0x10] sm:$0xf]
      %v1229 = vld [vmem:[%s1223 + $0x14] sm:$0xf]
      %v1230 = vld [vmem:[%s1223 + $0x18] sm:$0xf]
      %v1231 = vld [vmem:[%s1223 + $0x1c] sm:$0xf]
      %v1232 = vld [vmem:[%s1223 + $0x20] sm:$0xf]
      %v1233 = vld [vmem:[%s1223 + $0x24] sm:$0xf]
      %v1234 = vld [vmem:[%s1223 + $0x28] sm:$0xf]
      %v1235 = vld [vmem:[%s1223 + $0x2c] sm:$0xf]
      %v1236 = vld [vmem:[%s1223 + $0x30] sm:$0xf]
      %v1237 = vld [vmem:[%s1223 + $0x34] sm:$0xf]
      %v1238 = vld [vmem:[%s1223 + $0x38] sm:$0xf]
      %v1239 = vld [vmem:[%s1223 + $0x3c] sm:$0xf]
      %v1256 = vunpack.c.l.b16 %v1224
      %v1257 = vunpack.c.l.b16 %v1225
      %v1258 = vunpack.c.l.b16 %v1226
      %v1259 = vunpack.c.l.b16 %v1227
      %v1260 = vunpack.c.l.b16 %v1228
      %v1261 = vunpack.c.l.b16 %v1229
      %v1262 = vunpack.c.l.b16 %v1230
      %v1263 = vunpack.c.l.b16 %v1231
      %v1264 = vunpack.c.l.b16 %v1232
      %v1265 = vunpack.c.l.b16 %v1233
      %v1266 = vunpack.c.l.b16 %v1234
      %v1267 = vunpack.c.l.b16 %v1235
      %v1268 = vunpack.c.l.b16 %v1236
      %v1269 = vunpack.c.l.b16 %v1237
      %v1270 = vunpack.c.l.b16 %v1238
      %v1271 = vunpack.c.l.b16 %v1239
      %v1272 = vpack.c.b16 %v1257, %v1256
      %v1273 = vpack.c.b16 %v1259, %v1258
      %v1274 = vpack.c.b16 %v1261, %v1260
      %v1275 = vpack.c.b16 %v1263, %v1262
      %v1276 = vpack.c.b16 %v1265, %v1264
      %v1277 = vpack.c.b16 %v1267, %v1266
      %v1278 = vpack.c.b16 %v1269, %v1268
      %v1279 = vpack.c.b16 %v1271, %v1270
      %1288 = vmatprep.subr.bf16.mxu0 0
      %1289 = vmatpush1.bf16.msra.mxu0 %v1272
      %1290 = vmatprep.subr.bf16.mxu0 0
      %1291 = vmatpush1.bf16.msra.mxu0 %v1273
      %1292 = vmatprep.subr.bf16.mxu0 0
      %1293 = vmatpush1.bf16.msra.mxu0 %v1274
      %1294 = vmatprep.subr.bf16.mxu0 0
      %1295 = vmatpush1.bf16.msra.mxu0 %v1275
      %1296 = vmatprep.subr.bf16.mxu0 0
      %1297 = vmatpush1.bf16.msra.mxu0 %v1276
      %1298 = vmatprep.subr.bf16.mxu0 0
      %1299 = vmatpush1.bf16.msra.mxu0 %v1277
      %1300 = vmatprep.subr.bf16.mxu0 0
      %1301 = vmatpush1.bf16.msra.mxu0 %v1278
      %1302 = vmatprep.subr.bf16.mxu0 0
      %1303 = vmatpush1.bf16.msra.mxu0 %v1279
      %1304 = vmatprep.subr.bf16.mxu0 0
      %1305 = vmatpush1.bf16.msra.mxu0 0
      %1306 = vmatprep.subr.bf16.mxu0 0
      %1307 = vmatpush1.bf16.msra.mxu0 0
      %1308 = vmatprep.subr.bf16.mxu0 0
      %1309 = vmatpush1.bf16.msra.mxu0 0
      %1310 = vmatprep.subr.bf16.mxu0 0
      %1311 = vmatpush1.bf16.msra.mxu0 0
      %1312 = vmatprep.subr.bf16.mxu0 0
      %1313 = vmatpush1.bf16.msra.mxu0 0
      %1314 = vmatprep.subr.bf16.mxu0 0
      %1315 = vmatpush1.bf16.msra.mxu0 0
      %1316 = vmatprep.subr.bf16.mxu0 0
      %1317 = vmatpush1.bf16.msra.mxu0 0
      %1318 = vmatprep.subr.bf16.mxu0 0
      %1319 = vmatpush1.bf16.msra.mxu0 0
      %1320 = vmatprep.mubr.bf16.mxu0 0
      %1321 = vmatmul.mubr.bf16.gmra.mrb[0].mxu0 %v899
      %v1322 = vpop.f32.mrb[0].mxu0
      %v1323 = vadd.f32 0.0, %v1322
      %v1324 = vpop.f32.mrb[0].mxu0
      %v1325 = vpop.f32.mrb[0].mxu0
      %v1326 = vadd.f32 0.0, %v1325
      %v1327 = vpop.f32.mrb[0].mxu0
      %1328 = vmatprep.mubr.bf16.mxu0 0
      %1329 = vmatmul.mubr.bf16.gmra.mrb[0].mxu0 %v901
      %v1330 = vpop.f32.mrb[0].mxu0
      %v1331 = vpop.f32.mrb[0].mxu0
      %v1332 = vpop.f32.mrb[0].mxu0
      %v1333 = vadd.f32 0.0, %v1332
      %v1334 = vpop.f32.mrb[0].mxu0
      %1335 = vmatprep.mubr.bf16.mxu0 0
      %1336 = vmatmul.mubr.bf16.gmra.mrb[0].mxu0 %v903
      %v1337 = vpop.f32.mrb[0].mxu0
      %v1338 = vadd.f32 0.0, %v1337
      %v1339 = vpop.f32.mrb[0].mxu0
      %v1340 = vpop.f32.mrb[0].mxu0
      %v1341 = vpop.f32.mrb[0].mxu0
      %1342 = vmatprep.mubr.bf16.mxu0 0
      %1343 = vmatmul.mubr.bf16.gmra.mrb[0].mxu0 %v905
      %v1344 = vpop.f32.mrb[0].mxu0
      %v1345 = vadd.f32 0.0, %v1344
      %v1346 = vpop.f32.mrb[0].mxu0
      %v1347 = vpop.f32.mrb[0].mxu0
      %v1348 = vadd.f32 0.0, %v1347
      %v1349 = vpop.f32.mrb[0].mxu0
      %1350 = vmatprep.mubr.bf16.mxu0 0
      %1351 = vmatmul.mubr.bf16.gmra.mrb[0].mxu0 %v917
      %v1352 = vpop.f32.mrb[0].mxu0
      %v1353 = vpop.f32.mrb[0].mxu0
      %v1354 = vpop.f32.mrb[0].mxu0
      %v1355 = vadd.f32 0.0, %v1354
      %v1356 = vpop.f32.mrb[0].mxu0
      %1357 = vmatprep.mubr.bf16.mxu0 0
      %1358 = vmatmul.mubr.bf16.gmra.mrb[0].mxu0 %v887
      %v1359 = vpop.f32.mrb[0].mxu0
      %v1360 = vadd.f32 0.0, %v1359
      %v1361 = vpop.f32.mrb[0].mxu0
      %v1362 = vpop.f32.mrb[0].mxu0
      %v1363 = vpop.f32.mrb[0].mxu0
      %1364 = vdwg.mxu0
      %v1365 = vadd.f32 %v1181, %v1323
      %v1366 = vadd.f32 %v1184, %v1326
      %v1367 = vadd.f32 %v1191, %v1333
      %v1368 = vadd.f32 %v1196, %v1338
      %v1369 = vadd.f32 %v1203, %v1345
      %v1370 = vadd.f32 %v1206, %v1348
      %v1371 = vadd.f32 %v1213, %v1355
      %v1372 = vadd.f32 %v1218, %v1360
      %s1373 = scalar_lea.vmem %s6, 64
      %v1374 = vld [vmem:[%s1373] sm:$0xf]
      %v1375 = vld [vmem:[%s1373 + $0x4] sm:$0xf]
      %v1376 = vld [vmem:[%s1373 + $0x8] sm:$0xf]
      %v1377 = vld [vmem:[%s1373 + $0xc] sm:$0xf]
      %v1378 = vld [vmem:[%s1373 + $0x10] sm:$0xf]
      %v1379 = vld [vmem:[%s1373 + $0x14] sm:$0xf]
      %v1380 = vld [vmem:[%s1373 + $0x18] sm:$0xf]
      %v1381 = vld [vmem:[%s1373 + $0x1c] sm:$0xf]
      %v1382 = vld [vmem:[%s1373 + $0x20] sm:$0xf]
      %v1383 = vld [vmem:[%s1373 + $0x24] sm:$0xf]
      %v1384 = vld [vmem:[%s1373 + $0x28] sm:$0xf]
      %v1385 = vld [vmem:[%s1373 + $0x2c] sm:$0xf]
      %v1386 = vld [vmem:[%s1373 + $0x30] sm:$0xf]
      %v1387 = vld [vmem:[%s1373 + $0x34] sm:$0xf]
      %v1388 = vld [vmem:[%s1373 + $0x38] sm:$0xf]
      %v1389 = vld [vmem:[%s1373 + $0x3c] sm:$0xf]
      %vm1390 = vsmask.f32 7424
      %v1392 = vshrl.u32 %v885, 16
      %v1394 = vshll.u32 %v885, 16
      %v1396 = vrot.slane %v1394, 1
      %v1397 = vor.u32 %v1392, %v1396
      %v1398 = vshll.u32 %v914, 16
      %v1400 = vrot.slane %v1398, 1
      %v1401 = vsel %vm1390, %v1397, %v1400
      %v1402 = vshrl.u32 %v914, 16
      %v1404 = vor.u32 %v1402, %v1400
      %v1406 = vshll.u32 %v897, 16
      %v1408 = vrot.slane %v1406, 1
      %v1409 = vsel %vm1390, %v1404, %v1408
      %v1410 = vshrl.u32 %v897, 16
      %v1412 = vor.u32 %v1410, %v1408
      %v1414 = vshll.u32 %v899, 16
      %v1416 = vrot.slane %v1414, 1
      %v1417 = vsel %vm1390, %v1412, %v1416
      %v1418 = vshrl.u32 %v899, 16
      %v1420 = vor.u32 %v1418, %v1416
      %v1422 = vshll.u32 %v901, 16
      %v1424 = vrot.slane %v1422, 1
      %v1425 = vsel %vm1390, %v1420, %v1424
      %v1426 = vshrl.u32 %v901, 16
      %v1428 = vor.u32 %v1426, %v1424
      %v1430 = vshll.u32 %v903, 16
      %v1432 = vrot.slane %v1430, 1
      %v1433 = vsel %vm1390, %v1428, %v1432
      %v1434 = vshrl.u32 %v903, 16
      %v1436 = vor.u32 %v1434, %v1432
      %v1438 = vshll.u32 %v905, 16
      %v1440 = vrot.slane %v1438, 1
      %v1441 = vsel %vm1390, %v1436, %v1440
      %v1464 = vunpack.c.l.b16 %v1374
      %v1465 = vunpack.c.l.b16 %v1375
      %v1466 = vunpack.c.l.b16 %v1376
      %v1467 = vunpack.c.l.b16 %v1377
      %v1468 = vunpack.c.l.b16 %v1378
      %v1469 = vunpack.c.l.b16 %v1379
      %v1470 = vunpack.c.l.b16 %v1380
      %v1471 = vunpack.c.l.b16 %v1381
      %v1472 = vunpack.c.l.b16 %v1382
      %v1473 = vunpack.c.l.b16 %v1383
      %v1474 = vunpack.c.l.b16 %v1384
      %v1475 = vunpack.c.l.b16 %v1385
      %v1476 = vunpack.c.l.b16 %v1386
      %v1477 = vunpack.c.l.b16 %v1387
      %v1478 = vunpack.c.l.b16 %v1388
      %v1479 = vunpack.c.l.b16 %v1389
      %v1480 = vpack.c.b16 %v1465, %v1464
      %v1481 = vpack.c.b16 %v1467, %v1466
      %v1482 = vpack.c.b16 %v1469, %v1468
      %v1483 = vpack.c.b16 %v1471, %v1470
      %v1484 = vpack.c.b16 %v1473, %v1472
      %v1485 = vpack.c.b16 %v1475, %v1474
      %v1486 = vpack.c.b16 %v1477, %v1476
      %v1487 = vpack.c.b16 %v1479, %v1478
      %1496 = vmatprep.subr.bf16.mxu0 0
      %1497 = vmatpush1.bf16.msra.mxu0 %v1480
      %1498 = vmatprep.subr.bf16.mxu0 0
      %1499 = vmatpush1.bf16.msra.mxu0 %v1481
      %1500 = vmatprep.subr.bf16.mxu0 0
      %1501 = vmatpush1.bf16.msra.mxu0 %v1482
      %1502 = vmatprep.subr.bf16.mxu0 0
      %1503 = vmatpush1.bf16.msra.mxu0 %v1483
      %1504 = vmatprep.subr.bf16.mxu0 0
      %1505 = vmatpush1.bf16.msra.mxu0 %v1484
      %1506 = vmatprep.subr.bf16.mxu0 0
      %1507 = vmatpush1.bf16.msra.mxu0 %v1485
      %1508 = vmatprep.subr.bf16.mxu0 0
      %1509 = vmatpush1.bf16.msra.mxu0 %v1486
      %1510 = vmatprep.subr.bf16.mxu0 0
      %1511 = vmatpush1.bf16.msra.mxu0 %v1487
      %1512 = vmatprep.subr.bf16.mxu0 0
      %1513 = vmatpush1.bf16.msra.mxu0 0
      %1514 = vmatprep.subr.bf16.mxu0 0
      %1515 = vmatpush1.bf16.msra.mxu0 0
      %1516 = vmatprep.subr.bf16.mxu0 0
      %1517 = vmatpush1.bf16.msra.mxu0 0
      %1518 = vmatprep.subr.bf16.mxu0 0
      %1519 = vmatpush1.bf16.msra.mxu0 0
      %1520 = vmatprep.subr.bf16.mxu0 0
      %1521 = vmatpush1.bf16.msra.mxu0 0
      %1522 = vmatprep.subr.bf16.mxu0 0
      %1523 = vmatpush1.bf16.msra.mxu0 0
      %1524 = vmatprep.subr.bf16.mxu0 0
      %1525 = vmatpush1.bf16.msra.mxu0 0
      %1526 = vmatprep.subr.bf16.mxu0 0
      %1527 = vmatpush1.bf16.msra.mxu0 0
      %1528 = vmatprep.mubr.bf16.mxu0 0
      %1529 = vmatmul.mubr.bf16.gmra.mrb[0].mxu0 %v1401
      %v1530 = vpop.f32.mrb[0].mxu0
      %v1531 = vadd.f32 0.0, %v1530
      %v1532 = vpop.f32.mrb[0].mxu0
      %v1533 = vpop.f32.mrb[0].mxu0
      %v1534 = vadd.f32 0.0, %v1533
      %v1535 = vpop.f32.mrb[0].mxu0
      %1536 = vmatprep.mubr.bf16.mxu0 0
      %1537 = vmatmul.mubr.bf16.gmra.mrb[0].mxu0 %v1409
      %v1538 = vpop.f32.mrb[0].mxu0
      %v1539 = vpop.f32.mrb[0].mxu0
      %v1540 = vpop.f32.mrb[0].mxu0
      %v1541 = vadd.f32 0.0, %v1540
      %v1542 = vpop.f32.mrb[0].mxu0
      %1543 = vmatprep.mubr.bf16.mxu0 0
      %1544 = vmatmul.mubr.bf16.gmra.mrb[0].mxu0 %v1417
      %v1545 = vpop.f32.mrb[0].mxu0
      %v1546 = vadd.f32 0.0, %v1545
      %v1547 = vpop.f32.mrb[0].mxu0
      %v1548 = vpop.f32.mrb[0].mxu0
      %v1549 = vpop.f32.mrb[0].mxu0
      %1550 = vmatprep.mubr.bf16.mxu0 0
      %1551 = vmatmul.mubr.bf16.gmra.mrb[0].mxu0 %v1425
      %v1552 = vpop.f32.mrb[0].mxu0
      %v1553 = vadd.f32 0.0, %v1552
      %v1554 = vpop.f32.mrb[0].mxu0
      %v1555 = vpop.f32.mrb[0].mxu0
      %v1556 = vadd.f32 0.0, %v1555
      %v1557 = vpop.f32.mrb[0].mxu0
      %1558 = vmatprep.mubr.bf16.mxu0 0
      %1559 = vmatmul.mubr.bf16.gmra.mrb[0].mxu0 %v1433
      %v1560 = vpop.f32.mrb[0].mxu0
      %v1561 = vpop.f32.mrb[0].mxu0
      %v1562 = vpop.f32.mrb[0].mxu0
      %v1563 = vadd.f32 0.0, %v1562
      %v1564 = vpop.f32.mrb[0].mxu0
      %1565 = vmatprep.mubr.bf16.mxu0 0
      %1566 = vmatmul.mubr.bf16.gmra.mrb[0].mxu0 %v1441
      %v1567 = vpop.f32.mrb[0].mxu0
      %v1568 = vadd.f32 0.0, %v1567
      %v1569 = vpop.f32.mrb[0].mxu0
      %v1570 = vpop.f32.mrb[0].mxu0
      %v1571 = vpop.f32.mrb[0].mxu0
      %1572 = vdwg.mxu0
      %v1573 = vadd.f32 %v1365, %v1531
      %v1574 = vadd.f32 %v1366, %v1534
      %v1575 = vadd.f32 %v1367, %v1541
      %v1576 = vadd.f32 %v1368, %v1546
      %v1577 = vadd.f32 %v1369, %v1553
      %v1578 = vadd.f32 %v1370, %v1556
      %v1579 = vadd.f32 %v1371, %v1563
      %v1580 = vadd.f32 %v1372, %v1568
      %s1581 = scalar_lea.vmem %s6, 256
      %v1582 = vld [vmem:[%s1581] sm:$0xf]
      %v1583 = vld [vmem:[%s1581 + $0x4] sm:$0xf]
      %v1584 = vld [vmem:[%s1581 + $0x8] sm:$0xf]
      %v1585 = vld [vmem:[%s1581 + $0xc] sm:$0xf]
      %v1586 = vld [vmem:[%s1581 + $0x10] sm:$0xf]
      %v1587 = vld [vmem:[%s1581 + $0x14] sm:$0xf]
      %v1588 = vld [vmem:[%s1581 + $0x18] sm:$0xf]
      %v1589 = vld [vmem:[%s1581 + $0x1c] sm:$0xf]
      %v1590 = vld [vmem:[%s1581 + $0x20] sm:$0xf]
      %v1591 = vld [vmem:[%s1581 + $0x24] sm:$0xf]
      %v1592 = vld [vmem:[%s1581 + $0x28] sm:$0xf]
      %v1593 = vld [vmem:[%s1581 + $0x2c] sm:$0xf]
      %v1594 = vld [vmem:[%s1581 + $0x30] sm:$0xf]
      %v1595 = vld [vmem:[%s1581 + $0x34] sm:$0xf]
      %v1596 = vld [vmem:[%s1581 + $0x38] sm:$0xf]
      %v1597 = vld [vmem:[%s1581 + $0x3c] sm:$0xf]
      %vm1598 = vsmask.f32 3328
      %v1599 = vrot.slane %v1402, 4
      %v1600 = vrot.slane %v1398, 5
      %v1601 = vor.u32 %v1599, %v1600
      %v1602 = vrot.slane %v1410, 4
      %v1603 = vrot.slane %v1406, 5
      %v1604 = vor.u32 %v1602, %v1603
      %v1605 = vsel %vm1598, %v1601, %v1604
      %v1606 = vrot.slane %v1418, 4
      %v1607 = vrot.slane %v1414, 5
      %v1608 = vor.u32 %v1606, %v1607
      %v1609 = vsel %vm1598, %v1604, %v1608
      %v1610 = vrot.slane %v1426, 4
      %v1611 = vrot.slane %v1422, 5
      %v1612 = vor.u32 %v1610, %v1611
      %v1613 = vsel %vm1598, %v1608, %v1612
      %v1614 = vrot.slane %v1434, 4
      %v1615 = vrot.slane %v1430, 5
      %v1616 = vor.u32 %v1614, %v1615
      %v1617 = vsel %vm1598, %v1612, %v1616
      %v1618 = vshrl.u32 %v905, 16
      %v1620 = vrot.slane %v1618, 4
      %v1621 = vrot.slane %v1438, 5
      %v1622 = vor.u32 %v1620, %v1621
      %v1623 = vsel %vm1598, %v1616, %v1622
      %v1624 = vshrl.u32 %v917, 16
      %v1626 = vrot.slane %v1624, 4
      %v1627 = vshll.u32 %v917, 16
      %v1629 = vrot.slane %v1627, 5
      %v1630 = vor.u32 %v1626, %v1629
      %v1631 = vsel %vm1598, %v1622, %v1630
      %v1654 = vunpack.c.l.b16 %v1582
      %v1655 = vunpack.c.l.b16 %v1583
      %v1656 = vunpack.c.l.b16 %v1584
      %v1657 = vunpack.c.l.b16 %v1585
      %v1658 = vunpack.c.l.b16 %v1586
      %v1659 = vunpack.c.l.b16 %v1587
      %v1660 = vunpack.c.l.b16 %v1588
      %v1661 = vunpack.c.l.b16 %v1589
      %v1662 = vunpack.c.l.b16 %v1590
      %v1663 = vunpack.c.l.b16 %v1591
      %v1664 = vunpack.c.l.b16 %v1592
      %v1665 = vunpack.c.l.b16 %v1593
      %v1666 = vunpack.c.l.b16 %v1594
      %v1667 = vunpack.c.l.b16 %v1595
      %v1668 = vunpack.c.l.b16 %v1596
      %v1669 = vunpack.c.l.b16 %v1597
      %v1670 = vpack.c.b16 %v1655, %v1654
      %v1671 = vpack.c.b16 %v1657, %v1656
      %v1672 = vpack.c.b16 %v1659, %v1658
      %v1673 = vpack.c.b16 %v1661, %v1660
      %v1674 = vpack.c.b16 %v1663, %v1662
      %v1675 = vpack.c.b16 %v1665, %v1664
      %v1676 = vpack.c.b16 %v1667, %v1666
      %v1677 = vpack.c.b16 %v1669, %v1668
      %1686 = vmatprep.subr.bf16.mxu0 0
      %1687 = vmatpush1.bf16.msra.mxu0 %v1670
      %1688 = vmatprep.subr.bf16.mxu0 0
      %1689 = vmatpush1.bf16.msra.mxu0 %v1671
      %1690 = vmatprep.subr.bf16.mxu0 0
      %1691 = vmatpush1.bf16.msra.mxu0 %v1672
      %1692 = vmatprep.subr.bf16.mxu0 0
      %1693 = vmatpush1.bf16.msra.mxu0 %v1673
      %1694 = vmatprep.subr.bf16.mxu0 0
      %1695 = vmatpush1.bf16.msra.mxu0 %v1674
      %1696 = vmatprep.subr.bf16.mxu0 0
      %1697 = vmatpush1.bf16.msra.mxu0 %v1675
      %1698 = vmatprep.subr.bf16.mxu0 0
      %1699 = vmatpush1.bf16.msra.mxu0 %v1676
      %1700 = vmatprep.subr.bf16.mxu0 0
      %1701 = vmatpush1.bf16.msra.mxu0 %v1677
      %1702 = vmatprep.subr.bf16.mxu0 0
      %1703 = vmatpush1.bf16.msra.mxu0 0
      %1704 = vmatprep.subr.bf16.mxu0 0
      %1705 = vmatpush1.bf16.msra.mxu0 0
      %1706 = vmatprep.subr.bf16.mxu0 0
      %1707 = vmatpush1.bf16.msra.mxu0 0
      %1708 = vmatprep.subr.bf16.mxu0 0
      %1709 = vmatpush1.bf16.msra.mxu0 0
      %1710 = vmatprep.subr.bf16.mxu0 0
      %1711 = vmatpush1.bf16.msra.mxu0 0
      %1712 = vmatprep.subr.bf16.mxu0 0
      %1713 = vmatpush1.bf16.msra.mxu0 0
      %1714 = vmatprep.subr.bf16.mxu0 0
      %1715 = vmatpush1.bf16.msra.mxu0 0
      %1716 = vmatprep.subr.bf16.mxu0 0
      %1717 = vmatpush1.bf16.msra.mxu0 0
      %1718 = vmatprep.mubr.bf16.mxu0 0
      %1719 = vmatmul.mubr.bf16.gmra.mrb[0].mxu0 %v1605
      %v1720 = vpop.f32.mrb[0].mxu0
      %v1721 = vadd.f32 0.0, %v1720
      %v1722 = vpop.f32.mrb[0].mxu0
      %v1723 = vpop.f32.mrb[0].mxu0
      %v1724 = vadd.f32 0.0, %v1723
      %v1725 = vpop.f32.mrb[0].mxu0
      %1726 = vmatprep.mubr.bf16.mxu0 0
      %1727 = vmatmul.mubr.bf16.gmra.mrb[0].mxu0 %v1609
      %v1728 = vpop.f32.mrb[0].mxu0
      %v1729 = vpop.f32.mrb[0].mxu0
      %v1730 = vpop.f32.mrb[0].mxu0
      %v1731 = vadd.f32 0.0, %v1730
      %v1732 = vpop.f32.mrb[0].mxu0
      %1733 = vmatprep.mubr.bf16.mxu0 0
      %1734 = vmatmul.mubr.bf16.gmra.mrb[0].mxu0 %v1613
      %v1735 = vpop.f32.mrb[0].mxu0
      %v1736 = vadd.f32 0.0, %v1735
      %v1737 = vpop.f32.mrb[0].mxu0
      %v1738 = vpop.f32.mrb[0].mxu0
      %v1739 = vpop.f32.mrb[0].mxu0
      %1740 = vmatprep.mubr.bf16.mxu0 0
      %1741 = vmatmul.mubr.bf16.gmra.mrb[0].mxu0 %v1617
      %v1742 = vpop.f32.mrb[0].mxu0
      %v1743 = vadd.f32 0.0, %v1742
      %v1744 = vpop.f32.mrb[0].mxu0
      %v1745 = vpop.f32.mrb[0].mxu0
      %v1746 = vadd.f32 0.0, %v1745
      %v1747 = vpop.f32.mrb[0].mxu0
      %1748 = vmatprep.mubr.bf16.mxu0 0
      %1749 = vmatmul.mubr.bf16.gmra.mrb[0].mxu0 %v1623
      %v1750 = vpop.f32.mrb[0].mxu0
      %v1751 = vpop.f32.mrb[0].mxu0
      %v1752 = vpop.f32.mrb[0].mxu0
      %v1753 = vadd.f32 0.0, %v1752
      %v1754 = vpop.f32.mrb[0].mxu0
      %1755 = vmatprep.mubr.bf16.mxu0 0
      %1756 = vmatmul.mubr.bf16.gmra.mrb[0].mxu0 %v1631
      %v1757 = vpop.f32.mrb[0].mxu0
      %v1758 = vadd.f32 0.0, %v1757
      %v1759 = vpop.f32.mrb[0].mxu0
      %v1760 = vpop.f32.mrb[0].mxu0
      %v1761 = vpop.f32.mrb[0].mxu0
      %1762 = vdwg.mxu0
      %v1763 = vadd.f32 %v1573, %v1721
      %v1764 = vadd.f32 %v1574, %v1724
      %v1765 = vadd.f32 %v1575, %v1731
      %v1766 = vadd.f32 %v1576, %v1736
      %v1767 = vadd.f32 %v1577, %v1743
      %v1768 = vadd.f32 %v1578, %v1746
      %v1769 = vadd.f32 %v1579, %v1753
      %v1770 = vadd.f32 %v1580, %v1758
      %s1771 = scalar_lea.vmem %s6, 448
      %v1772 = vld [vmem:[%s1771] sm:$0xf]
      %v1773 = vld [vmem:[%s1771 + $0x4] sm:$0xf]
      %v1774 = vld [vmem:[%s1771 + $0x8] sm:$0xf]
      %v1775 = vld [vmem:[%s1771 + $0xc] sm:$0xf]
      %v1776 = vld [vmem:[%s1771 + $0x10] sm:$0xf]
      %v1777 = vld [vmem:[%s1771 + $0x14] sm:$0xf]
      %v1778 = vld [vmem:[%s1771 + $0x18] sm:$0xf]
      %v1779 = vld [vmem:[%s1771 + $0x1c] sm:$0xf]
      %v1780 = vld [vmem:[%s1771 + $0x20] sm:$0xf]
      %v1781 = vld [vmem:[%s1771 + $0x24] sm:$0xf]
      %v1782 = vld [vmem:[%s1771 + $0x28] sm:$0xf]
      %v1783 = vld [vmem:[%s1771 + $0x2c] sm:$0xf]
      %v1784 = vld [vmem:[%s1771 + $0x30] sm:$0xf]
      %v1785 = vld [vmem:[%s1771 + $0x34] sm:$0xf]
      %v1786 = vld [vmem:[%s1771 + $0x38] sm:$0xf]
      %v1787 = vld [vmem:[%s1771 + $0x3c] sm:$0xf]
      %v1788 = vor.u32 %v1618, %v1440
      %v1789 = vrot.slane %v1627, 1
      %v1790 = vsel %vm1390, %v1788, %v1789
      %v1791 = vor.u32 %v1624, %v1789
      %v1793 = vshll.u32 %v887, 16
      %v1795 = vrot.slane %v1793, 1
      %v1796 = vsel %vm1390, %v1791, %v1795
      %v1797 = vshrl.u32 %v887, 16
      %v1799 = vor.u32 %v1797, %v1795
      %v1801 = vshll.u32 0, 16
      %v1803 = vrot.slane %v1801, 1
      %v1804 = vsel %vm1390, %v1799, %v1803
      %v1824 = vunpack.c.l.b16 %v1772
      %v1825 = vunpack.c.l.b16 %v1773
      %v1826 = vunpack.c.l.b16 %v1774
      %v1827 = vunpack.c.l.b16 %v1775
      %v1828 = vunpack.c.l.b16 %v1776
      %v1829 = vunpack.c.l.b16 %v1777
      %v1830 = vunpack.c.l.b16 %v1778
      %v1831 = vunpack.c.l.b16 %v1779
      %v1832 = vunpack.c.l.b16 %v1780
      %v1833 = vunpack.c.l.b16 %v1781
      %v1834 = vunpack.c.l.b16 %v1782
      %v1835 = vunpack.c.l.b16 %v1783
      %v1836 = vunpack.c.l.b16 %v1784
      %v1837 = vunpack.c.l.b16 %v1785
      %v1838 = vunpack.c.l.b16 %v1786
      %v1839 = vunpack.c.l.b16 %v1787
      %v1840 = vpack.c.b16 %v1825, %v1824
      %v1841 = vpack.c.b16 %v1827, %v1826
      %v1842 = vpack.c.b16 %v1829, %v1828
      %v1843 = vpack.c.b16 %v1831, %v1830
      %v1844 = vpack.c.b16 %v1833, %v1832
      %v1845 = vpack.c.b16 %v1835, %v1834
      %v1846 = vpack.c.b16 %v1837, %v1836
      %v1847 = vpack.c.b16 %v1839, %v1838
      %1856 = vmatprep.subr.bf16.mxu0 0
      %1857 = vmatpush1.bf16.msra.mxu0 %v1840
      %1858 = vmatprep.subr.bf16.mxu0 0
      %1859 = vmatpush1.bf16.msra.mxu0 %v1841
      %1860 = vmatprep.subr.bf16.mxu0 0
      %1861 = vmatpush1.bf16.msra.mxu0 %v1842
      %1862 = vmatprep.subr.bf16.mxu0 0
      %1863 = vmatpush1.bf16.msra.mxu0 %v1843
      %1864 = vmatprep.subr.bf16.mxu0 0
      %1865 = vmatpush1.bf16.msra.mxu0 %v1844
      %1866 = vmatprep.subr.bf16.mxu0 0
      %1867 = vmatpush1.bf16.msra.mxu0 %v1845
      %1868 = vmatprep.subr.bf16.mxu0 0
      %1869 = vmatpush1.bf16.msra.mxu0 %v1846
      %1870 = vmatprep.subr.bf16.mxu0 0
      %1871 = vmatpush1.bf16.msra.mxu0 %v1847
      %1872 = vmatprep.subr.bf16.mxu0 0
      %1873 = vmatpush1.bf16.msra.mxu0 0
      %1874 = vmatprep.subr.bf16.mxu0 0
      %1875 = vmatpush1.bf16.msra.mxu0 0
      %1876 = vmatprep.subr.bf16.mxu0 0
      %1877 = vmatpush1.bf16.msra.mxu0 0
      %1878 = vmatprep.subr.bf16.mxu0 0
      %1879 = vmatpush1.bf16.msra.mxu0 0
      %1880 = vmatprep.subr.bf16.mxu0 0
      %1881 = vmatpush1.bf16.msra.mxu0 0
      %1882 = vmatprep.subr.bf16.mxu0 0
      %1883 = vmatpush1.bf16.msra.mxu0 0
      %1884 = vmatprep.subr.bf16.mxu0 0
      %1885 = vmatpush1.bf16.msra.mxu0 0
      %1886 = vmatprep.subr.bf16.mxu0 0
      %1887 = vmatpush1.bf16.msra.mxu0 0
      %1888 = vmatprep.mubr.bf16.mxu0 0
      %1889 = vmatmul.mubr.bf16.gmra.mrb[0].mxu0 %v1425
      %v1890 = vpop.f32.mrb[0].mxu0
      %v1891 = vadd.f32 0.0, %v1890
      %v1892 = vpop.f32.mrb[0].mxu0
      %v1893 = vpop.f32.mrb[0].mxu0
      %v1894 = vadd.f32 0.0, %v1893
      %v1895 = vpop.f32.mrb[0].mxu0
      %1896 = vmatprep.mubr.bf16.mxu0 0
      %1897 = vmatmul.mubr.bf16.gmra.mrb[0].mxu0 %v1433
      %v1898 = vpop.f32.mrb[0].mxu0
      %v1899 = vpop.f32.mrb[0].mxu0
      %v1900 = vpop.f32.mrb[0].mxu0
      %v1901 = vadd.f32 0.0, %v1900
      %v1902 = vpop.f32.mrb[0].mxu0
      %1903 = vmatprep.mubr.bf16.mxu0 0
      %1904 = vmatmul.mubr.bf16.gmra.mrb[0].mxu0 %v1441
      %v1905 = vpop.f32.mrb[0].mxu0
      %v1906 = vadd.f32 0.0, %v1905
      %v1907 = vpop.f32.mrb[0].mxu0
      %v1908 = vpop.f32.mrb[0].mxu0
      %v1909 = vpop.f32.mrb[0].mxu0
      %1910 = vmatprep.mubr.bf16.mxu0 0
      %1911 = vmatmul.mubr.bf16.gmra.mrb[0].mxu0 %v1790
      %v1912 = vpop.f32.mrb[0].mxu0
      %v1913 = vadd.f32 0.0, %v1912
      %v1914 = vpop.f32.mrb[0].mxu0
      %v1915 = vpop.f32.mrb[0].mxu0
      %v1916 = vadd.f32 0.0, %v1915
      %v1917 = vpop.f32.mrb[0].mxu0
      %1918 = vmatprep.mubr.bf16.mxu0 0
      %1919 = vmatmul.mubr.bf16.gmra.mrb[0].mxu0 %v1796
      %v1920 = vpop.f32.mrb[0].mxu0
      %v1921 = vpop.f32.mrb[0].mxu0
      %v1922 = vpop.f32.mrb[0].mxu0
      %v1923 = vadd.f32 0.0, %v1922
      %v1924 = vpop.f32.mrb[0].mxu0
      %1925 = vmatprep.mubr.bf16.mxu0 0
      %1926 = vmatmul.mubr.bf16.gmra.mrb[0].mxu0 %v1804
      %v1927 = vpop.f32.mrb[0].mxu0
      %v1928 = vadd.f32 0.0, %v1927
      %v1929 = vpop.f32.mrb[0].mxu0
      %v1930 = vpop.f32.mrb[0].mxu0
      %v1931 = vpop.f32.mrb[0].mxu0
      %1932 = vdwg.mxu0
      %v1933 = vadd.f32 %v1763, %v1891
      %v1934 = vadd.f32 %v1764, %v1894
      %v1935 = vadd.f32 %v1765, %v1901
      %v1936 = vadd.f32 %v1766, %v1906
      %v1937 = vadd.f32 %v1767, %v1913
      %v1938 = vadd.f32 %v1768, %v1916
      %v1939 = vadd.f32 %v1769, %v1923
      %v1940 = vadd.f32 %v1770, %v1928
      %s1941 = scalar_lea.vmem %s6, 128
      %v1942 = vld [vmem:[%s1941] sm:$0xf]
      %v1943 = vld [vmem:[%s1941 + $0x4] sm:$0xf]
      %v1944 = vld [vmem:[%s1941 + $0x8] sm:$0xf]
      %v1945 = vld [vmem:[%s1941 + $0xc] sm:$0xf]
      %v1946 = vld [vmem:[%s1941 + $0x10] sm:$0xf]
      %v1947 = vld [vmem:[%s1941 + $0x14] sm:$0xf]
      %v1948 = vld [vmem:[%s1941 + $0x18] sm:$0xf]
      %v1949 = vld [vmem:[%s1941 + $0x1c] sm:$0xf]
      %v1950 = vld [vmem:[%s1941 + $0x20] sm:$0xf]
      %v1951 = vld [vmem:[%s1941 + $0x24] sm:$0xf]
      %v1952 = vld [vmem:[%s1941 + $0x28] sm:$0xf]
      %v1953 = vld [vmem:[%s1941 + $0x2c] sm:$0xf]
      %v1954 = vld [vmem:[%s1941 + $0x30] sm:$0xf]
      %v1955 = vld [vmem:[%s1941 + $0x34] sm:$0xf]
      %v1956 = vld [vmem:[%s1941 + $0x38] sm:$0xf]
      %v1957 = vld [vmem:[%s1941 + $0x3c] sm:$0xf]
      %vm1959 = vcmask 1046528
      %v1960 = vrot.slane %v885, 1
      %v1961 = vrot.slane %v914, 1
      %v1962 = vsel %vm1959, %v1960, %v1961
      %v1963 = vrot.slane %v897, 1
      %v1964 = vsel %vm1959, %v1961, %v1963
      %v1965 = vrot.slane %v899, 1
      %v1966 = vsel %vm1959, %v1963, %v1965
      %v1967 = vrot.slane %v901, 1
      %v1968 = vsel %vm1959, %v1965, %v1967
      %v1969 = vrot.slane %v903, 1
      %v1970 = vsel %vm1959, %v1967, %v1969
      %v1971 = vrot.slane %v905, 1
      %v1972 = vsel %vm1959, %v1969, %v1971
      %v1995 = vunpack.c.l.b16 %v1942
      %v1996 = vunpack.c.l.b16 %v1943
      %v1997 = vunpack.c.l.b16 %v1944
      %v1998 = vunpack.c.l.b16 %v1945
      %v1999 = vunpack.c.l.b16 %v1946
      %v2000 = vunpack.c.l.b16 %v1947
      %v2001 = vunpack.c.l.b16 %v1948
      %v2002 = vunpack.c.l.b16 %v1949
      %v2003 = vunpack.c.l.b16 %v1950
      %v2004 = vunpack.c.l.b16 %v1951
      %v2005 = vunpack.c.l.b16 %v1952
      %v2006 = vunpack.c.l.b16 %v1953
      %v2007 = vunpack.c.l.b16 %v1954
      %v2008 = vunpack.c.l.b16 %v1955
      %v2009 = vunpack.c.l.b16 %v1956
      %v2010 = vunpack.c.l.b16 %v1957
      %v2011 = vpack.c.b16 %v1996, %v1995
      %v2012 = vpack.c.b16 %v1998, %v1997
      %v2013 = vpack.c.b16 %v2000, %v1999
      %v2014 = vpack.c.b16 %v2002, %v2001
      %v2015 = vpack.c.b16 %v2004, %v2003
      %v2016 = vpack.c.b16 %v2006, %v2005
      %v2017 = vpack.c.b16 %v2008, %v2007
      %v2018 = vpack.c.b16 %v2010, %v2009
      %2027 = vmatprep.subr.bf16.mxu0 0
      %2028 = vmatpush1.bf16.msra.mxu0 %v2011
      %2029 = vmatprep.subr.bf16.mxu0 0
      %2030 = vmatpush1.bf16.msra.mxu0 %v2012
      %2031 = vmatprep.subr.bf16.mxu0 0
      %2032 = vmatpush1.bf16.msra.mxu0 %v2013
      %2033 = vmatprep.subr.bf16.mxu0 0
      %2034 = vmatpush1.bf16.msra.mxu0 %v2014
      %2035 = vmatprep.subr.bf16.mxu0 0
      %2036 = vmatpush1.bf16.msra.mxu0 %v2015
      %2037 = vmatprep.subr.bf16.mxu0 0
      %2038 = vmatpush1.bf16.msra.mxu0 %v2016
      %2039 = vmatprep.subr.bf16.mxu0 0
      %2040 = vmatpush1.bf16.msra.mxu0 %v2017
      %2041 = vmatprep.subr.bf16.mxu0 0
      %2042 = vmatpush1.bf16.msra.mxu0 %v2018
      %2043 = vmatprep.subr.bf16.mxu0 0
      %2044 = vmatpush1.bf16.msra.mxu0 0
      %2045 = vmatprep.subr.bf16.mxu0 0
      %2046 = vmatpush1.bf16.msra.mxu0 0
      %2047 = vmatprep.subr.bf16.mxu0 0
      %2048 = vmatpush1.bf16.msra.mxu0 0
      %2049 = vmatprep.subr.bf16.mxu0 0
      %2050 = vmatpush1.bf16.msra.mxu0 0
      %2051 = vmatprep.subr.bf16.mxu0 0
      %2052 = vmatpush1.bf16.msra.mxu0 0
      %2053 = vmatprep.subr.bf16.mxu0 0
      %2054 = vmatpush1.bf16.msra.mxu0 0
      %2055 = vmatprep.subr.bf16.mxu0 0
      %2056 = vmatpush1.bf16.msra.mxu0 0
      %2057 = vmatprep.subr.bf16.mxu0 0
      %2058 = vmatpush1.bf16.msra.mxu0 0
      %2059 = vmatprep.mubr.bf16.mxu0 0
      %2060 = vmatmul.mubr.bf16.gmra.mrb[0].mxu0 %v1962
      %v2061 = vpop.f32.mrb[0].mxu0
      %v2062 = vadd.f32 0.0, %v2061
      %v2063 = vpop.f32.mrb[0].mxu0
      %v2064 = vpop.f32.mrb[0].mxu0
      %v2065 = vadd.f32 0.0, %v2064
      %v2066 = vpop.f32.mrb[0].mxu0
      %2067 = vmatprep.mubr.bf16.mxu0 0
      %2068 = vmatmul.mubr.bf16.gmra.mrb[0].mxu0 %v1964
      %v2069 = vpop.f32.mrb[0].mxu0
      %v2070 = vpop.f32.mrb[0].mxu0
      %v2071 = vpop.f32.mrb[0].mxu0
      %v2072 = vadd.f32 0.0, %v2071
      %v2073 = vpop.f32.mrb[0].mxu0
      %2074 = vmatprep.mubr.bf16.mxu0 0
      %2075 = vmatmul.mubr.bf16.gmra.mrb[0].mxu0 %v1966
      %v2076 = vpop.f32.mrb[0].mxu0
      %v2077 = vadd.f32 0.0, %v2076
      %v2078 = vpop.f32.mrb[0].mxu0
      %v2079 = vpop.f32.mrb[0].mxu0
      %v2080 = vpop.f32.mrb[0].mxu0
      %2081 = vmatprep.mubr.bf16.mxu0 0
      %2082 = vmatmul.mubr.bf16.gmra.mrb[0].mxu0 %v1968
      %v2083 = vpop.f32.mrb[0].mxu0
      %v2084 = vadd.f32 0.0, %v2083
      %v2085 = vpop.f32.mrb[0].mxu0
      %v2086 = vpop.f32.mrb[0].mxu0
      %v2087 = vadd.f32 0.0, %v2086
      %v2088 = vpop.f32.mrb[0].mxu0
      %2089 = vmatprep.mubr.bf16.mxu0 0
      %2090 = vmatmul.mubr.bf16.gmra.mrb[0].mxu0 %v1970
      %v2091 = vpop.f32.mrb[0].mxu0
      %v2092 = vpop.f32.mrb[0].mxu0
      %v2093 = vpop.f32.mrb[0].mxu0
      %v2094 = vadd.f32 0.0, %v2093
      %v2095 = vpop.f32.mrb[0].mxu0
      %2096 = vmatprep.mubr.bf16.mxu0 0
      %2097 = vmatmul.mubr.bf16.gmra.mrb[0].mxu0 %v1972
      %v2098 = vpop.f32.mrb[0].mxu0
      %v2099 = vadd.f32 0.0, %v2098
      %v2100 = vpop.f32.mrb[0].mxu0
      %v2101 = vpop.f32.mrb[0].mxu0
      %v2102 = vpop.f32.mrb[0].mxu0
      %2103 = vdwg.mxu0
      %v2104 = vadd.f32 %v1933, %v2062
      %v2105 = vadd.f32 %v1934, %v2065
      %v2106 = vadd.f32 %v1935, %v2072
      %v2107 = vadd.f32 %v1936, %v2077
      %v2108 = vadd.f32 %v1937, %v2084
      %v2109 = vadd.f32 %v1938, %v2087
      %v2110 = vadd.f32 %v1939, %v2094
      %v2111 = vadd.f32 %v1940, %v2099
      %s2112 = scalar_lea.vmem %s6, 320
      %v2113 = vld [vmem:[%s2112] sm:$0xf]
      %v2114 = vld [vmem:[%s2112 + $0x4] sm:$0xf]
      %v2115 = vld [vmem:[%s2112 + $0x8] sm:$0xf]
      %v2116 = vld [vmem:[%s2112 + $0xc] sm:$0xf]
      %v2117 = vld [vmem:[%s2112 + $0x10] sm:$0xf]
      %v2118 = vld [vmem:[%s2112 + $0x14] sm:$0xf]
      %v2119 = vld [vmem:[%s2112 + $0x18] sm:$0xf]
      %v2120 = vld [vmem:[%s2112 + $0x1c] sm:$0xf]
      %v2121 = vld [vmem:[%s2112 + $0x20] sm:$0xf]
      %v2122 = vld [vmem:[%s2112 + $0x24] sm:$0xf]
      %v2123 = vld [vmem:[%s2112 + $0x28] sm:$0xf]
      %v2124 = vld [vmem:[%s2112 + $0x2c] sm:$0xf]
      %v2125 = vld [vmem:[%s2112 + $0x30] sm:$0xf]
      %v2126 = vld [vmem:[%s2112 + $0x34] sm:$0xf]
      %v2127 = vld [vmem:[%s2112 + $0x38] sm:$0xf]
      %v2128 = vld [vmem:[%s2112 + $0x3c] sm:$0xf]
      %vm2129 = vcmask 1042432
      %v2130 = vrot.slane %v914, 5
      %v2131 = vrot.slane %v897, 5
      %v2132 = vsel %vm2129, %v2130, %v2131
      %v2133 = vrot.slane %v899, 5
      %v2134 = vsel %vm2129, %v2131, %v2133
      %v2135 = vrot.slane %v901, 5
      %v2136 = vsel %vm2129, %v2133, %v2135
      %v2137 = vrot.slane %v903, 5
      %v2138 = vsel %vm2129, %v2135, %v2137
      %v2139 = vrot.slane %v905, 5
      %v2140 = vsel %vm2129, %v2137, %v2139
      %v2141 = vrot.slane %v917, 5
      %v2142 = vsel %vm2129, %v2139, %v2141
      %v2165 = vunpack.c.l.b16 %v2113
      %v2166 = vunpack.c.l.b16 %v2114
      %v2167 = vunpack.c.l.b16 %v2115
      %v2168 = vunpack.c.l.b16 %v2116
      %v2169 = vunpack.c.l.b16 %v2117
      %v2170 = vunpack.c.l.b16 %v2118
      %v2171 = vunpack.c.l.b16 %v2119
      %v2172 = vunpack.c.l.b16 %v2120
      %v2173 = vunpack.c.l.b16 %v2121
      %v2174 = vunpack.c.l.b16 %v2122
      %v2175 = vunpack.c.l.b16 %v2123
      %v2176 = vunpack.c.l.b16 %v2124
      %v2177 = vunpack.c.l.b16 %v2125
      %v2178 = vunpack.c.l.b16 %v2126
      %v2179 = vunpack.c.l.b16 %v2127
      %v2180 = vunpack.c.l.b16 %v2128
      %v2181 = vpack.c.b16 %v2166, %v2165
      %v2182 = vpack.c.b16 %v2168, %v2167
      %v2183 = vpack.c.b16 %v2170, %v2169
      %v2184 = vpack.c.b16 %v2172, %v2171
      %v2185 = vpack.c.b16 %v2174, %v2173
      %v2186 = vpack.c.b16 %v2176, %v2175
      %v2187 = vpack.c.b16 %v2178, %v2177
      %v2188 = vpack.c.b16 %v2180, %v2179
      %2197 = vmatprep.subr.bf16.mxu0 0
      %2198 = vmatpush1.bf16.msra.mxu0 %v2181
      %2199 = vmatprep.subr.bf16.mxu0 0
      %2200 = vmatpush1.bf16.msra.mxu0 %v2182
      %2201 = vmatprep.subr.bf16.mxu0 0
      %2202 = vmatpush1.bf16.msra.mxu0 %v2183
      %2203 = vmatprep.subr.bf16.mxu0 0
      %2204 = vmatpush1.bf16.msra.mxu0 %v2184
      %2205 = vmatprep.subr.bf16.mxu0 0
      %2206 = vmatpush1.bf16.msra.mxu0 %v2185
      %2207 = vmatprep.subr.bf16.mxu0 0
      %2208 = vmatpush1.bf16.msra.mxu0 %v2186
      %2209 = vmatprep.subr.bf16.mxu0 0
      %2210 = vmatpush1.bf16.msra.mxu0 %v2187
      %2211 = vmatprep.subr.bf16.mxu0 0
      %2212 = vmatpush1.bf16.msra.mxu0 %v2188
      %2213 = vmatprep.subr.bf16.mxu0 0
      %2214 = vmatpush1.bf16.msra.mxu0 0
      %2215 = vmatprep.subr.bf16.mxu0 0
      %2216 = vmatpush1.bf16.msra.mxu0 0
      %2217 = vmatprep.subr.bf16.mxu0 0
      %2218 = vmatpush1.bf16.msra.mxu0 0
      %2219 = vmatprep.subr.bf16.mxu0 0
      %2220 = vmatpush1.bf16.msra.mxu0 0
      %2221 = vmatprep.subr.bf16.mxu0 0
      %2222 = vmatpush1.bf16.msra.mxu0 0
      %2223 = vmatprep.subr.bf16.mxu0 0
      %2224 = vmatpush1.bf16.msra.mxu0 0
      %2225 = vmatprep.subr.bf16.mxu0 0
      %2226 = vmatpush1.bf16.msra.mxu0 0
      %2227 = vmatprep.subr.bf16.mxu0 0
      %2228 = vmatpush1.bf16.msra.mxu0 0
      %2229 = vmatprep.mubr.bf16.mxu0 0
      %2230 = vmatmul.mubr.bf16.gmra.mrb[0].mxu0 %v2132
      %v2231 = vpop.f32.mrb[0].mxu0
      %v2232 = vadd.f32 0.0, %v2231
      %v2233 = vpop.f32.mrb[0].mxu0
      %v2234 = vpop.f32.mrb[0].mxu0
      %v2235 = vadd.f32 0.0, %v2234
      %v2236 = vpop.f32.mrb[0].mxu0
      %2237 = vmatprep.mubr.bf16.mxu0 0
      %2238 = vmatmul.mubr.bf16.gmra.mrb[0].mxu0 %v2134
      %v2239 = vpop.f32.mrb[0].mxu0
      %v2240 = vpop.f32.mrb[0].mxu0
      %v2241 = vpop.f32.mrb[0].mxu0
      %v2242 = vadd.f32 0.0, %v2241
      %v2243 = vpop.f32.mrb[0].mxu0
      %2244 = vmatprep.mubr.bf16.mxu0 0
      %2245 = vmatmul.mubr.bf16.gmra.mrb[0].mxu0 %v2136
      %v2246 = vpop.f32.mrb[0].mxu0
      %v2247 = vadd.f32 0.0, %v2246
      %v2248 = vpop.f32.mrb[0].mxu0
      %v2249 = vpop.f32.mrb[0].mxu0
      %v2250 = vpop.f32.mrb[0].mxu0
      %2251 = vmatprep.mubr.bf16.mxu0 0
      %2252 = vmatmul.mubr.bf16.gmra.mrb[0].mxu0 %v2138
      %v2253 = vpop.f32.mrb[0].mxu0
      %v2254 = vadd.f32 0.0, %v2253
      %v2255 = vpop.f32.mrb[0].mxu0
      %v2256 = vpop.f32.mrb[0].mxu0
      %v2257 = vadd.f32 0.0, %v2256
      %v2258 = vpop.f32.mrb[0].mxu0
      %2259 = vmatprep.mubr.bf16.mxu0 0
      %2260 = vmatmul.mubr.bf16.gmra.mrb[0].mxu0 %v2140
      %v2261 = vpop.f32.mrb[0].mxu0
      %v2262 = vpop.f32.mrb[0].mxu0
      %v2263 = vpop.f32.mrb[0].mxu0
      %v2264 = vadd.f32 0.0, %v2263
      %v2265 = vpop.f32.mrb[0].mxu0
      %2266 = vmatprep.mubr.bf16.mxu0 0
      %2267 = vmatmul.mubr.bf16.gmra.mrb[0].mxu0 %v2142
      %v2268 = vpop.f32.mrb[0].mxu0
      %v2269 = vadd.f32 0.0, %v2268
      %v2270 = vpop.f32.mrb[0].mxu0
      %v2271 = vpop.f32.mrb[0].mxu0
      %v2272 = vpop.f32.mrb[0].mxu0
      %2273 = vdwg.mxu0
      %v2274 = vadd.f32 %v2104, %v2232
      %v2275 = vadd.f32 %v2105, %v2235
      %v2276 = vadd.f32 %v2106, %v2242
      %v2277 = vadd.f32 %v2107, %v2247
      %v2278 = vadd.f32 %v2108, %v2254
      %v2279 = vadd.f32 %v2109, %v2257
      %v2280 = vadd.f32 %v2110, %v2264
      %v2281 = vadd.f32 %v2111, %v2269
      %s2282 = scalar_lea.vmem %s6, 512
      %v2283 = vld [vmem:[%s2282] sm:$0xf]
      %v2284 = vld [vmem:[%s2282 + $0x4] sm:$0xf]
      %v2285 = vld [vmem:[%s2282 + $0x8] sm:$0xf]
      %v2286 = vld [vmem:[%s2282 + $0xc] sm:$0xf]
      %v2287 = vld [vmem:[%s2282 + $0x10] sm:$0xf]
      %v2288 = vld [vmem:[%s2282 + $0x14] sm:$0xf]
      %v2289 = vld [vmem:[%s2282 + $0x18] sm:$0xf]
      %v2290 = vld [vmem:[%s2282 + $0x1c] sm:$0xf]
      %v2291 = vld [vmem:[%s2282 + $0x20] sm:$0xf]
      %v2292 = vld [vmem:[%s2282 + $0x24] sm:$0xf]
      %v2293 = vld [vmem:[%s2282 + $0x28] sm:$0xf]
      %v2294 = vld [vmem:[%s2282 + $0x2c] sm:$0xf]
      %v2295 = vld [vmem:[%s2282 + $0x30] sm:$0xf]
      %v2296 = vld [vmem:[%s2282 + $0x34] sm:$0xf]
      %v2297 = vld [vmem:[%s2282 + $0x38] sm:$0xf]
      %v2298 = vld [vmem:[%s2282 + $0x3c] sm:$0xf]
      %v2301 = vrot.slane %v917, 1
      %v2302 = vsel %vm1959, %v1971, %v2301
      %v2303 = vrot.slane %v887, 1
      %v2304 = vsel %vm1959, %v2301, %v2303
      %v2305 = vrot.slane 0, 1
      %v2306 = vsel %vm1959, %v2303, %v2305
      %v2326 = vunpack.c.l.b16 %v2283
      %v2327 = vunpack.c.l.b16 %v2284
      %v2328 = vunpack.c.l.b16 %v2285
      %v2329 = vunpack.c.l.b16 %v2286
      %v2330 = vunpack.c.l.b16 %v2287
      %v2331 = vunpack.c.l.b16 %v2288
      %v2332 = vunpack.c.l.b16 %v2289
      %v2333 = vunpack.c.l.b16 %v2290
      %v2334 = vunpack.c.l.b16 %v2291
      %v2335 = vunpack.c.l.b16 %v2292
      %v2336 = vunpack.c.l.b16 %v2293
      %v2337 = vunpack.c.l.b16 %v2294
      %v2338 = vunpack.c.l.b16 %v2295
      %v2339 = vunpack.c.l.b16 %v2296
      %v2340 = vunpack.c.l.b16 %v2297
      %v2341 = vunpack.c.l.b16 %v2298
      %v2342 = vpack.c.b16 %v2327, %v2326
      %v2343 = vpack.c.b16 %v2329, %v2328
      %v2344 = vpack.c.b16 %v2331, %v2330
      %v2345 = vpack.c.b16 %v2333, %v2332
      %v2346 = vpack.c.b16 %v2335, %v2334
      %v2347 = vpack.c.b16 %v2337, %v2336
      %v2348 = vpack.c.b16 %v2339, %v2338
      %v2349 = vpack.c.b16 %v2341, %v2340
      %2358 = vmatprep.subr.bf16.mxu0 0
      %2359 = vmatpush1.bf16.msra.mxu0 %v2342
      %2360 = vmatprep.subr.bf16.mxu0 0
      %2361 = vmatpush1.bf16.msra.mxu0 %v2343
      %2362 = vmatprep.subr.bf16.mxu0 0
      %2363 = vmatpush1.bf16.msra.mxu0 %v2344
      %2364 = vmatprep.subr.bf16.mxu0 0
      %2365 = vmatpush1.bf16.msra.mxu0 %v2345
      %2366 = vmatprep.subr.bf16.mxu0 0
      %2367 = vmatpush1.bf16.msra.mxu0 %v2346
      %2368 = vmatprep.subr.bf16.mxu0 0
      %2369 = vmatpush1.bf16.msra.mxu0 %v2347
      %2370 = vmatprep.subr.bf16.mxu0 0
      %2371 = vmatpush1.bf16.msra.mxu0 %v2348
      %2372 = vmatprep.subr.bf16.mxu0 0
      %2373 = vmatpush1.bf16.msra.mxu0 %v2349
      %2374 = vmatprep.subr.bf16.mxu0 0
      %2375 = vmatpush1.bf16.msra.mxu0 0
      %2376 = vmatprep.subr.bf16.mxu0 0
      %2377 = vmatpush1.bf16.msra.mxu0 0
      %2378 = vmatprep.subr.bf16.mxu0 0
      %2379 = vmatpush1.bf16.msra.mxu0 0
      %2380 = vmatprep.subr.bf16.mxu0 0
      %2381 = vmatpush1.bf16.msra.mxu0 0
      %2382 = vmatprep.subr.bf16.mxu0 0
      %2383 = vmatpush1.bf16.msra.mxu0 0
      %2384 = vmatprep.subr.bf16.mxu0 0
      %2385 = vmatpush1.bf16.msra.mxu0 0
      %2386 = vmatprep.subr.bf16.mxu0 0
      %2387 = vmatpush1.bf16.msra.mxu0 0
      %2388 = vmatprep.subr.bf16.mxu0 0
      %2389 = vmatpush1.bf16.msra.mxu0 0
      %2390 = vmatprep.mubr.bf16.mxu0 0
      %2391 = vmatmul.mubr.bf16.gmra.mrb[0].mxu0 %v1968
      %v2392 = vpop.f32.mrb[0].mxu0
      %v2393 = vadd.f32 0.0, %v2392
      %v2394 = vpop.f32.mrb[0].mxu0
      %v2395 = vpop.f32.mrb[0].mxu0
      %v2396 = vadd.f32 0.0, %v2395
      %v2397 = vpop.f32.mrb[0].mxu0
      %2398 = vmatprep.mubr.bf16.mxu0 0
      %2399 = vmatmul.mubr.bf16.gmra.mrb[0].mxu0 %v1970
      %v2400 = vpop.f32.mrb[0].mxu0
      %v2401 = vpop.f32.mrb[0].mxu0
      %v2402 = vpop.f32.mrb[0].mxu0
      %v2403 = vadd.f32 0.0, %v2402
      %v2404 = vpop.f32.mrb[0].mxu0
      %2405 = vmatprep.mubr.bf16.mxu0 0
      %2406 = vmatmul.mubr.bf16.gmra.mrb[0].mxu0 %v1972
      %v2407 = vpop.f32.mrb[0].mxu0
      %v2408 = vadd.f32 0.0, %v2407
      %v2409 = vpop.f32.mrb[0].mxu0
      %v2410 = vpop.f32.mrb[0].mxu0
      %v2411 = vpop.f32.mrb[0].mxu0
      %2412 = vmatprep.mubr.bf16.mxu0 0
      %2413 = vmatmul.mubr.bf16.gmra.mrb[0].mxu0 %v2302
      %v2414 = vpop.f32.mrb[0].mxu0
      %v2415 = vadd.f32 0.0, %v2414
      %v2416 = vpop.f32.mrb[0].mxu0
      %v2417 = vpop.f32.mrb[0].mxu0
      %v2418 = vadd.f32 0.0, %v2417
      %v2419 = vpop.f32.mrb[0].mxu0
      %2420 = vmatprep.mubr.bf16.mxu0 0
      %2421 = vmatmul.mubr.bf16.gmra.mrb[0].mxu0 %v2304
      %v2422 = vpop.f32.mrb[0].mxu0
      %v2423 = vpop.f32.mrb[0].mxu0
      %v2424 = vpop.f32.mrb[0].mxu0
      %v2425 = vadd.f32 0.0, %v2424
      %v2426 = vpop.f32.mrb[0].mxu0
      %2427 = vmatprep.mubr.bf16.mxu0 0
      %2428 = vmatmul.mubr.bf16.gmra.mrb[0].mxu0 %v2306
      %v2429 = vpop.f32.mrb[0].mxu0
      %v2430 = vadd.f32 0.0, %v2429
      %v2431 = vpop.f32.mrb[0].mxu0
      %v2432 = vpop.f32.mrb[0].mxu0
      %v2433 = vpop.f32.mrb[0].mxu0
      %2434 = vdwg.mxu0
      %v2435 = vadd.f32 %v2274, %v2393
      %v2436 = vadd.f32 %v2275, %v2396
      %v2437 = vadd.f32 %v2276, %v2403
      %v2438 = vadd.f32 %v2277, %v2408
      %v2439 = vadd.f32 %v2278, %v2415
      %v2440 = vadd.f32 %v2279, %v2418
      %v2441 = vadd.f32 %v2280, %v2425
      %v2442 = vadd.f32 %v2281, %v2430
      %2443 = vst [vmem:[%s416] sm:$0xff] %v2435
      %2444 = vst [vmem:[%s416 + $0x8] sm:$0xff] %v2436
      %2445 = vst [vmem:[%s416 + $0x10] sm:$0xff] %v2437
      %2446 = vst [vmem:[%s416 + $0x18] sm:$0xff] %v2438
      %2447 = vst [vmem:[%s416 + $0x20] sm:$0xff] %v2439
      %2448 = vst [vmem:[%s416 + $0x28] sm:$0xff] %v2440
      %2449 = vst [vmem:[%s416 + $0x30] sm:$0xff] %v2441
      %2450 = vst [vmem:[%s416 + $0x38] sm:$0xff] %v2442
      %p2451 = scmp.lt.s32.totalorder %s22, 1
      %s2452 = scalar_select %p2451, %s22, 1
      %p2453 = scmp.lt.s32.totalorder %s23, 3
      %s2454 = scalar_select %p2453, %s23, 3
      %s2455 = smul.addr %s2454, 8
      %s2456 = smul.addr %s2452, 32
      %s2457 = sadd.s32 %s2455, %s2456
      %s2458 = smul.addr %s2457, 8
      %s2459 = scalar_lea.vmem %s7, %s2458
      // Predicated region
      $region49: #{spatial_modulated_conv2d.1} parent=47 // pred_check
        %p2460 = pneg %p225
      $region50: #{spatial_modulated_conv2d.1} parent=47 // pred_check_branch
        %2462 = sbr.rel (%p2460) target = $region52
      $region51: #{spatial_modulated_conv2d.1} parent=47 // pred_region
        _
      $region52: #{spatial_modulated_conv2d.1} parent=47 // pred_fallthru
        _
    $region48: #{spatial_modulated_conv2d.1} parent=5 // pred_fallthru
      _
    %p2463 = scmp.le.s32.totalorder 2, %s13
    // Predicated region
    $region53: #{spatial_modulated_conv2d.1} parent=5 // pred_check
      %p2464 = pneg %p2463
    $region54: #{spatial_modulated_conv2d.1} parent=5 // pred_check_branch
      %2466 = sbr.rel (%p2464) target = $region56
    $region55: #{spatial_modulated_conv2d.1} parent=5 // pred_region
      %s2467 = ssub.s32 %s13, 2
      // Predicated region
      $region57: #{spatial_modulated_conv2d.1} parent=55 // pred_check
        %p2468 = pneg %p231
      $region58: #{spatial_modulated_conv2d.1} parent=55 // pred_check_branch
        %2470 = sbr.rel (%p2468) target = $region60
      $region59: #{spatial_modulated_conv2d.1} parent=55 // pred_region
        %p2471 = scmp.lt.s32.totalorder %s24, 1
        %s2472 = scalar_select %p2471, %s24, 1
        %p2473 = scmp.lt.s32.totalorder %s25, 3
        %s2474 = scalar_select %p2473, %s25, 3
        %s2475 = smul.addr %s2474, 8
        %s2476 = smul.addr %s2472, 32
        %s2477 = sadd.s32 %s2475, %s2476
        %s2478 = smul.addr %s2477, 8
        %s2479 = scalar_lea.vmem %s7, %s2478
      $region60: #{spatial_modulated_conv2d.1} parent=55 // pred_fallthru
        _
    $region56: #{spatial_modulated_conv2d.1} parent=5 // pred_fallthru
      _
  $region6: #{spatial_modulated_conv2d.1} parent=0 // loop_footer
    %s17 = sadd.s32 1, %s13
  $region7: #{spatial_modulated_conv2d.1} parent=0 // loop_footer_branch
    %12 = sbr.rel target = $region3
  $region8: #{spatial_modulated_conv2d.1} parent=0 // loop_exit
    _

</llo_original>
